<compile_context>
chip_gen: v7x
topology: tpu7x:2x2x1
jax: 0.10.0
libtpu: 0.0.40
codegen_flags: <defaults>
</compile_context>

<pallas_src>
import math

import jax
import jax.numpy as jnp
from jax import lax
from jax.experimental import pallas as pl
from jax.experimental.pallas import tpu as pltpu

# ---- config (small, consistent with BERT-style module) ----
B = 2           # batch
S = 8           # sequence length
H = 32          # hidden size
NH = 4          # num_attention_heads
HD = H // NH    # attention_head_size
LN_EPS = 1e-12


def bert_attention_kernel(x_ref, mask_ref,
                          wq_ref, wk_ref, wv_ref,
                          bq_ref, bk_ref, bv_ref,
                          wo_ref, bo_ref, gamma_ref, beta_ref,
                          out_ref, probs_ref,
                          acc_ref):
    """One grid step == one attention head. All head selection is done by BlockSpecs."""
    n = pl.program_id(0)
    x = x_ref[...]                                     # (B*S, H)

    # Per-head projections on the MXU. Outputs land at lane offset 0 — no lane slicing.
    # 1/sqrt(HD) is already folded into wq/bq (wrapper side).
    q = jnp.dot(x, wq_ref[0], preferred_element_type=jnp.float32) + bq_ref[0]   # (B*S, HD)
    k = jnp.dot(x, wk_ref[0], preferred_element_type=jnp.float32) + bk_ref[0]
    v = jnp.dot(x, wv_ref[0], preferred_element_type=jnp.float32) + bv_ref[0]

    # Leading-dim (sublane-tile aligned) splits only — no lane movement.
    qb = q.reshape(B, S, HD)
    kb = k.reshape(B, S, HD)
    vb = v.reshape(B, S, HD)

    # Scores on the VPU: broadcast-multiply + lane-sum (tiny 8x8x8 contraction per
    # batch; an MXU matmul here would be result-FIFO-latency bound, not throughput).
    scores = jnp.sum(qb[:, :, None, :] * kb[:, None, :, :], axis=-1)   # (B, S, S) f32
    scores = scores + mask_ref[...]                    # (B,1,S) additive mask, broadcast over queries

    # Numerically-stable softmax; EUP reciprocal + one Newton step (restores f32 acc).
    m = jnp.max(scores, axis=-1, keepdims=True)
    e = jnp.exp(scores - m)
    denom = jnp.sum(e, axis=-1, keepdims=True)
    r = pl.reciprocal(denom, approx=True)
    r = r * (2.0 - denom * r)                          # Newton step: rel-err ~ O(eps^2)
    p = e * r                                          # (B, S, S)

    probs_ref[0] = p                                   # this head's probs block

    # Context on the VPU: sum over keys (sublane axis).
    ctx = jnp.sum(p[:, :, :, None] * vb[:, None, :, :], axis=2)        # (B, S, HD)
    ctx2 = ctx.reshape(B * S, HD)                      # leading-dim merge only

    # Per-head contribution of the output dense (MXU), accumulated across the head grid.
    head_out = jnp.dot(ctx2, wo_ref[0], preferred_element_type=jnp.float32)   # (B*S, H)

    @pl.when(n == 0)
    def _():
        acc_ref[...] = x + bo_ref[...]                 # residual + output bias, added once

    acc_ref[...] += head_out

    @pl.when(n == NH - 1)
    def _():
        res = acc_ref[...]
        mean = jnp.mean(res, axis=-1, keepdims=True)
        c = res - mean
        var = jnp.mean(c * c, axis=-1, keepdims=True)
        out = c * lax.rsqrt(var + LN_EPS) * gamma_ref[...] + beta_ref[...]
        out_ref[...] = out.astype(out_ref.dtype)


def bert_attention(x, mask, params):
    """x: (B,S,H) f32; mask: (B,S) f32 additive. Returns (out (B,S,H), probs (B,NH,S,S))."""
    # ---- wrapper-side layout prep only (free / outside the kernel) ----
    x2d = x.reshape(B * S, H)
    mask_b = mask.reshape(B, 1, S)

    inv_sqrt_d = 1.0 / math.sqrt(HD)
    # PyTorch Linear weights are (out, in); output feature index = head*HD + d.
    # Build per-head (in, out_head) weight blocks so the grid's BlockSpecs do the head split.
    wq_h = (params["wq"] * inv_sqrt_d).reshape(NH, HD, H).transpose(0, 2, 1)  # (NH, H, HD)
    wk_h = params["wk"].reshape(NH, HD, H).transpose(0, 2, 1)
    wv_h = params["wv"].reshape(NH, HD, H).transpose(0, 2, 1)
    bq_h = (params["bq"] * inv_sqrt_d).reshape(NH, 1, HD)
    bk_h = params["bk"].reshape(NH, 1, HD)
    bv_h = params["bv"].reshape(NH, 1, HD)
    # Output dense: proj = ctx @ Wo^T; ctx features are (head, d) head-major.
    wo_h = params["wo"].T.reshape(NH, HD, H)                                  # (NH, HD, H)
    bo = params["bo"].reshape(1, H)
    gamma = params["gamma"].reshape(1, H)
    beta = params["beta"].reshape(1, H)

    out2d, probs_h = pl.pallas_call(
        bert_attention_kernel,
        grid=(NH,),
        in_specs=[
            pl.BlockSpec((B * S, H), lambda n: (0, 0)),       # x (resident)
            pl.BlockSpec((B, 1, S), lambda n: (0, 0, 0)),     # additive mask
            pl.BlockSpec((1, H, HD), lambda n: (n, 0, 0)),    # Wq head n
            pl.BlockSpec((1, H, HD), lambda n: (n, 0, 0)),    # Wk head n
            pl.BlockSpec((1, H, HD), lambda n: (n, 0, 0)),    # Wv head n
            pl.BlockSpec((1, 1, HD), lambda n: (n, 0, 0)),    # bq head n
            pl.BlockSpec((1, 1, HD), lambda n: (n, 0, 0)),    # bk head n
            pl.BlockSpec((1, 1, HD), lambda n: (n, 0, 0)),    # bv head n
            pl.BlockSpec((1, HD, H), lambda n: (n, 0, 0)),    # Wo rows for head n
            pl.BlockSpec((1, H), lambda n: (0, 0)),           # bo
            pl.BlockSpec((1, H), lambda n: (0, 0)),           # gamma
            pl.BlockSpec((1, H), lambda n: (0, 0)),           # beta
        ],
        out_specs=(
            pl.BlockSpec((B * S, H), lambda n: (0, 0)),       # out: resident across heads
            pl.BlockSpec((1, B, S, S), lambda n: (n, 0, 0, 0)),  # probs for head n
        ),
        out_shape=(
            jax.ShapeDtypeStruct((B * S, H), jnp.float32),
            jax.ShapeDtypeStruct((NH, B, S, S), jnp.float32),
        ),
        scratch_shapes=[pltpu.VMEM((B * S, H), jnp.float32)],  # output-proj accumulator
        compiler_params=pltpu.CompilerParams(
            # Head axis carries the output accumulator -> "arbitrary".
            # At real BERT sizes, add a leading "parallel" batch/query axis for v7x's
            # two TensorCores (irrelevant at B=2, S=8 where per-step overhead dominates).
            dimension_semantics=("arbitrary",)),
    )(x2d, mask_b, wq_h, wk_h, wv_h, bq_h, bk_h, bv_h, wo_h, bo, gamma, beta)

    # (NH, B, S, S) -> (B, NH, S, S): tiny wrapper-side transpose, outside the kernel.
    return out2d.reshape(B, S, H), jnp.transpose(probs_h, (1, 0, 2, 3))


def reference(x, mask, params):
    """Plain-JAX reference replicating the PyTorch forward (eval mode)."""
    def lin(a, w, b):
        return jnp.einsum("bsh,oh->bso", a, w) + b
    q = lin(x, params["wq"], params["bq"])
    k = lin(x, params["wk"], params["bk"])
    v = lin(x, params["wv"], params["bv"])

    def split_heads(t):  # (B,S,H) -> (B,NH,S,HD)
        return t.reshape(B, S, NH, HD).transpose(0, 2, 1, 3)

    qh, kh, vh = split_heads(q), split_heads(k), split_heads(v)
    scores = jnp.einsum("bhqd,bhkd->bhqk", qh, kh) / math.sqrt(HD)
    scores = scores + mask[:, None, None, :]
    probs = jax.nn.softmax(scores, axis=-1)
    ctx = jnp.einsum("bhqk,bhkd->bhqd", probs, vh)
    ctx = ctx.transpose(0, 2, 1, 3).reshape(B, S, H)

    proj = jnp.einsum("bsh,oh->bso", ctx, params["wo"]) + params["bo"]
    res = proj + x
    mean = res.mean(-1, keepdims=True)
    var = ((res - mean) ** 2).mean(-1, keepdims=True)
    out = (res - mean) / jnp.sqrt(var + LN_EPS) * params["gamma"] + params["beta"]
    return out, probs


if __name__ == "__main__":
    key = jax.random.PRNGKey(0)
    ks = jax.random.split(key, 12)

    scale = 0.05
    params = {
        "wq": scale * jax.random.normal(ks[0], (H, H), jnp.float32),
        "bq": scale * jax.random.normal(ks[1], (H,), jnp.float32),
        "wk": scale * jax.random.normal(ks[2], (H, H), jnp.float32),
        "bk": scale * jax.random.normal(ks[3], (H,), jnp.float32),
        "wv": scale * jax.random.normal(ks[4], (H, H), jnp.float32),
        "bv": scale * jax.random.normal(ks[5], (H,), jnp.float32),
        "wo": scale * jax.random.normal(ks[6], (H, H), jnp.float32),
        "bo": scale * jax.random.normal(ks[7], (H,), jnp.float32),
        "gamma": jnp.ones((H,), jnp.float32),
        "beta": jnp.zeros((H,), jnp.float32),
    }

    x = jax.random.normal(ks[8], (B, S, H), jnp.float32)
    # standard BERT additive mask: 0 for attend, -10000 for masked positions
    pad = (jax.random.uniform(ks[9], (B, S)) > 0.8).astype(jnp.float32)
    mask = pad * -10000.0

    out, probs = bert_attention(x, mask, params)
    out = jax.block_until_ready(out)
    probs = jax.block_until_ready(probs)

    ref_out, ref_probs = reference(x, mask, params)
    assert jnp.allclose(out, ref_out, atol=1e-4, rtol=1e-4), "output mismatch"
    assert jnp.allclose(probs, ref_probs, atol=1e-5, rtol=1e-4), "probs mismatch"

    print("KERNEL_OK")
</pallas_src>

<mosaic_0001>
module attributes {stable_mosaic.version = 11 : i64} {
  func.func @bert_attention_kernel(%arg0: i32, %arg1: memref<16x32xf32, #tpu.memory_space<vmem>>, %arg2: memref<2x1x8xf32, #tpu.memory_space<vmem>>, %arg3: memref<1x32x8xf32, #tpu.memory_space<vmem>>, %arg4: memref<1x32x8xf32, #tpu.memory_space<vmem>>, %arg5: memref<1x32x8xf32, #tpu.memory_space<vmem>>, %arg6: memref<1x1x8xf32, #tpu.memory_space<vmem>>, %arg7: memref<1x1x8xf32, #tpu.memory_space<vmem>>, %arg8: memref<1x1x8xf32, #tpu.memory_space<vmem>>, %arg9: memref<1x8x32xf32, #tpu.memory_space<vmem>>, %arg10: memref<1x32xf32, #tpu.memory_space<vmem>>, %arg11: memref<1x32xf32, #tpu.memory_space<vmem>>, %arg12: memref<1x32xf32, #tpu.memory_space<vmem>>, %arg13: memref<16x32xf32, #tpu.memory_space<vmem>>, %arg14: memref<1x2x8x8xf32, #tpu.memory_space<vmem>>, %arg15: memref<16x32xf32, #tpu.memory_space<vmem>>) attributes {dimension_semantics = [#tpu.dimension_semantics<arbitrary>], iteration_bounds = array<i64: 4>, scalar_prefetch = 0 : i64, scratch_operands = 1 : i64, tpu.core_type = #tpu.core_type<tc>, window_params = [{pipeline_mode = #tpu.pipeline_mode<synchronous>, transform_indices = @transform_0, window_bounds = array<i64: 16, 32>}, {pipeline_mode = #tpu.pipeline_mode<synchronous>, transform_indices = @transform_1, window_bounds = array<i64: 2, 1, 8>}, {transform_indices = @transform_2, window_bounds = array<i64: 1, 32, 8>}, {transform_indices = @transform_3, window_bounds = array<i64: 1, 32, 8>}, {transform_indices = @transform_4, window_bounds = array<i64: 1, 32, 8>}, {transform_indices = @transform_5, window_bounds = array<i64: 1, 1, 8>}, {transform_indices = @transform_6, window_bounds = array<i64: 1, 1, 8>}, {transform_indices = @transform_7, window_bounds = array<i64: 1, 1, 8>}, {transform_indices = @transform_8, window_bounds = array<i64: 1, 8, 32>}, {pipeline_mode = #tpu.pipeline_mode<synchronous>, transform_indices = @transform_9, window_bounds = array<i64: 1, 32>}, {pipeline_mode = #tpu.pipeline_mode<synchronous>, transform_indices = @transform_10, window_bounds = array<i64: 1, 32>}, {pipeline_mode = #tpu.pipeline_mode<synchronous>, transform_indices = @transform_11, window_bounds = array<i64: 1, 32>}, {pipeline_mode = #tpu.pipeline_mode<synchronous>, transform_indices = @transform_12, window_bounds = array<i64: 16, 32>}, {transform_indices = @transform_13, window_bounds = array<i64: 1, 2, 8, 8>}]} {
    %c0 = arith.constant 0 : index
    %c0_0 = arith.constant 0 : index
    %0 = vector.load %arg1[%c0, %c0_0] : memref<16x32xf32, #tpu.memory_space<vmem>>, vector<16x32xf32>
    %c0_1 = arith.constant 0 : index
    %c0_2 = arith.constant 0 : index
    %c0_3 = arith.constant 0 : index
    %1 = vector.load %arg3[%c0_1, %c0_2, %c0_3] : memref<1x32x8xf32, #tpu.memory_space<vmem>>, vector<1x32x8xf32>
    %2 = vector.shape_cast %1 : vector<1x32x8xf32> to vector<32x8xf32>
    %cst = arith.constant dense<0.000000e+00> : vector<16x8xf32>
    %3 = tpu.matmul %0, %2, %cst {dimension_numbers = #tpu.dot_dimension_numbers<[1], [0], [0], [1], [0, 0, 1, 1], [], []>} : vector<16x32xf32>, vector<32x8xf32>, vector<16x8xf32> -> vector<16x8xf32>
    %c0_4 = arith.constant 0 : index
    %c0_5 = arith.constant 0 : index
    %c0_6 = arith.constant 0 : index
    %4 = vector.load %arg6[%c0_4, %c0_5, %c0_6] : memref<1x1x8xf32, #tpu.memory_space<vmem>>, vector<1x1x8xf32>
    %5 = vector.shape_cast %4 : vector<1x1x8xf32> to vector<1x8xf32>
    %6 = vector.broadcast %5 : vector<1x8xf32> to vector<16x8xf32>
    %7 = arith.addf %3, %6 : vector<16x8xf32>
    %c0_7 = arith.constant 0 : index
    %c0_8 = arith.constant 0 : index
    %c0_9 = arith.constant 0 : index
    %8 = vector.load %arg4[%c0_7, %c0_8, %c0_9] : memref<1x32x8xf32, #tpu.memory_space<vmem>>, vector<1x32x8xf32>
    %9 = vector.shape_cast %8 : vector<1x32x8xf32> to vector<32x8xf32>
    %cst_10 = arith.constant dense<0.000000e+00> : vector<16x8xf32>
    %10 = tpu.matmul %0, %9, %cst_10 {dimension_numbers = #tpu.dot_dimension_numbers<[1], [0], [0], [1], [0, 0, 1, 1], [], []>} : vector<16x32xf32>, vector<32x8xf32>, vector<16x8xf32> -> vector<16x8xf32>
    %c0_11 = arith.constant 0 : index
    %c0_12 = arith.constant 0 : index
    %c0_13 = arith.constant 0 : index
    %11 = vector.load %arg7[%c0_11, %c0_12, %c0_13] : memref<1x1x8xf32, #tpu.memory_space<vmem>>, vector<1x1x8xf32>
    %12 = vector.shape_cast %11 : vector<1x1x8xf32> to vector<1x8xf32>
    %13 = vector.broadcast %12 : vector<1x8xf32> to vector<16x8xf32>
    %14 = arith.addf %10, %13 : vector<16x8xf32>
    %c0_14 = arith.constant 0 : index
    %c0_15 = arith.constant 0 : index
    %c0_16 = arith.constant 0 : index
    %15 = vector.load %arg5[%c0_14, %c0_15, %c0_16] : memref<1x32x8xf32, #tpu.memory_space<vmem>>, vector<1x32x8xf32>
    %16 = vector.shape_cast %15 : vector<1x32x8xf32> to vector<32x8xf32>
    %cst_17 = arith.constant dense<0.000000e+00> : vector<16x8xf32>
    %17 = tpu.matmul %0, %16, %cst_17 {dimension_numbers = #tpu.dot_dimension_numbers<[1], [0], [0], [1], [0, 0, 1, 1], [], []>} : vector<16x32xf32>, vector<32x8xf32>, vector<16x8xf32> -> vector<16x8xf32>
    %c0_18 = arith.constant 0 : index
    %c0_19 = arith.constant 0 : index
    %c0_20 = arith.constant 0 : index
    %18 = vector.load %arg8[%c0_18, %c0_19, %c0_20] : memref<1x1x8xf32, #tpu.memory_space<vmem>>, vector<1x1x8xf32>
    %19 = vector.shape_cast %18 : vector<1x1x8xf32> to vector<1x8xf32>
    %20 = vector.broadcast %19 : vector<1x8xf32> to vector<16x8xf32>
    %21 = arith.addf %17, %20 : vector<16x8xf32>
    %22 = vector.shape_cast %7 : vector<16x8xf32> to vector<2x8x8xf32>
    %23 = vector.shape_cast %14 : vector<16x8xf32> to vector<2x8x8xf32>
    %24 = vector.shape_cast %21 : vector<16x8xf32> to vector<2x8x8xf32>
    %25 = vector.shape_cast %22 : vector<2x8x8xf32> to vector<2x8x1x8xf32>
    %26 = vector.shape_cast %23 : vector<2x8x8xf32> to vector<2x1x8x8xf32>
    %27 = vector.broadcast %25 : vector<2x8x1x8xf32> to vector<2x8x8x8xf32>
    %28 = vector.broadcast %26 : vector<2x1x8x8xf32> to vector<2x8x8x8xf32>
    %29 = arith.mulf %27, %28 : vector<2x8x8x8xf32>
    %cst_21 = arith.constant dense<0.000000e+00> : vector<2x8x8xf32>
    %30 = vector.multi_reduction <add>, %29, %cst_21 [3] : vector<2x8x8x8xf32> to vector<2x8x8xf32>
    %c0_22 = arith.constant 0 : index
    %c0_23 = arith.constant 0 : index
    %c0_24 = arith.constant 0 : index
    %31 = vector.load %arg2[%c0_22, %c0_23, %c0_24] : memref<2x1x8xf32, #tpu.memory_space<vmem>>, vector<2x1x8xf32>
    %32 = vector.broadcast %31 : vector<2x1x8xf32> to vector<2x8x8xf32>
    %33 = arith.addf %30, %32 : vector<2x8x8xf32>
    %cst_25 = arith.constant dense<0xFF800000> : vector<2x8xf32>
    %34 = vector.multi_reduction <maximumf>, %33, %cst_25 [2] : vector<2x8x8xf32> to vector<2x8xf32>
    %35 = vector.shape_cast %34 : vector<2x8xf32> to vector<2x8x1xf32>
    %36 = vector.broadcast %35 : vector<2x8x1xf32> to vector<2x8x8xf32>
    %37 = arith.subf %33, %36 : vector<2x8x8xf32>
    %38 = math.exp %37 : vector<2x8x8xf32>
    %cst_26 = arith.constant dense<0.000000e+00> : vector<2x8xf32>
    %39 = vector.multi_reduction <add>, %38, %cst_26 [2] : vector<2x8x8xf32> to vector<2x8xf32>
    %40 = vector.shape_cast %39 : vector<2x8xf32> to vector<2x8x1xf32>
    %41 = tpu.reciprocal %40 {approx = true} : vector<2x8x1xf32> -> vector<2x8x1xf32>
    %42 = arith.mulf %40, %41 : vector<2x8x1xf32>
    %cst_27 = arith.constant 2.000000e+00 : f32
    %43 = vector.broadcast %cst_27 : f32 to vector<2x8x1xf32>
    %44 = arith.subf %43, %42 : vector<2x8x1xf32>
    %45 = arith.mulf %41, %44 : vector<2x8x1xf32>
    %46 = vector.broadcast %45 : vector<2x8x1xf32> to vector<2x8x8xf32>
    %47 = arith.mulf %38, %46 : vector<2x8x8xf32>
    %c0_28 = arith.constant 0 : index
    %c0_29 = arith.constant 0 : index
    %c0_30 = arith.constant 0 : index
    %c0_31 = arith.constant 0 : index
    %48 = vector.load %arg14[%c0_28, %c0_29, %c0_30, %c0_31] : memref<1x2x8x8xf32, #tpu.memory_space<vmem>>, vector<1x2x8x8xf32>
    %49 = vector.shape_cast %48 : vector<1x2x8x8xf32> to vector<2x8x8xf32>
    %50 = vector.shape_cast %47 : vector<2x8x8xf32> to vector<1x2x8x8xf32>
    tpu.vector_store %arg14[%c0_28, %c0_29, %c0_30, %c0_31], %50 {strides = array<i32>} : memref<1x2x8x8xf32, #tpu.memory_space<vmem>>, vector<1x2x8x8xf32>,
    %51 = vector.shape_cast %47 : vector<2x8x8xf32> to vector<2x8x8x1xf32>
    %52 = vector.shape_cast %24 : vector<2x8x8xf32> to vector<2x1x8x8xf32>
    %53 = vector.broadcast %51 : vector<2x8x8x1xf32> to vector<2x8x8x8xf32>
    %54 = vector.broadcast %52 : vector<2x1x8x8xf32> to vector<2x8x8x8xf32>
    %55 = arith.mulf %53, %54 : vector<2x8x8x8xf32>
    %cst_32 = arith.constant dense<0.000000e+00> : vector<2x8x8xf32>
    %56 = vector.multi_reduction <add>, %55, %cst_32 [2] : vector<2x8x8x8xf32> to vector<2x8x8xf32>
    %57 = vector.shape_cast %56 : vector<2x8x8xf32> to vector<16x8xf32>
    %c0_33 = arith.constant 0 : index
    %c0_34 = arith.constant 0 : index
    %c0_35 = arith.constant 0 : index
    %58 = vector.load %arg9[%c0_33, %c0_34, %c0_35] : memref<1x8x32xf32, #tpu.memory_space<vmem>>, vector<1x8x32xf32>
    %59 = vector.shape_cast %58 : vector<1x8x32xf32> to vector<8x32xf32>
    %cst_36 = arith.constant dense<0.000000e+00> : vector<16x32xf32>
    %60 = tpu.matmul %57, %59, %cst_36 {dimension_numbers = #tpu.dot_dimension_numbers<[1], [0], [0], [1], [0, 0, 1, 1], [], []>} : vector<16x8xf32>, vector<8x32xf32>, vector<16x32xf32> -> vector<16x32xf32>
    %c0_i32 = arith.constant 0 : i32
    %61 = arith.cmpi eq, %arg0, %c0_i32 : i32
    %62 = arith.extui %61 : i1 to i32
    %c0_i32_37 = arith.constant 0 : i32
    %63 = arith.cmpi ne, %62, %c0_i32_37 : i32
    scf.if %63 {
      %c0_43 = arith.constant 0 : index
      %c0_44 = arith.constant 0 : index
      %70 = vector.load %arg10[%c0_43, %c0_44] : memref<1x32xf32, #tpu.memory_space<vmem>>, vector<1x32xf32>
      %71 = vector.broadcast %70 : vector<1x32xf32> to vector<16x32xf32>
      %72 = arith.addf %0, %71 : vector<16x32xf32>
      %c0_45 = arith.constant 0 : index
      %c0_46 = arith.constant 0 : index
      %73 = vector.load %arg15[%c0_45, %c0_46] : memref<16x32xf32, #tpu.memory_space<vmem>>, vector<16x32xf32>
      tpu.vector_store %arg15[%c0_45, %c0_46], %72 {strides = array<i32>} : memref<16x32xf32, #tpu.memory_space<vmem>>, vector<16x32xf32>,
    } else {
    }
    %c0_38 = arith.constant 0 : index
    %c0_39 = arith.constant 0 : index
    %64 = vector.load %arg15[%c0_38, %c0_39] : memref<16x32xf32, #tpu.memory_space<vmem>>, vector<16x32xf32>
    %65 = arith.addf %64, %60 : vector<16x32xf32>
    %c0_40 = arith.constant 0 : index
    %c0_41 = arith.constant 0 : index
    %66 = vector.load %arg15[%c0_40, %c0_41] : memref<16x32xf32, #tpu.memory_space<vmem>>, vector<16x32xf32>
    tpu.vector_store %arg15[%c0_40, %c0_41], %65 {strides = array<i32>} : memref<16x32xf32, #tpu.memory_space<vmem>>, vector<16x32xf32>,
    %c3_i32 = arith.constant 3 : i32
    %67 = arith.cmpi eq, %arg0, %c3_i32 : i32
    %68 = arith.extui %67 : i1 to i32
    %c0_i32_42 = arith.constant 0 : i32
    %69 = arith.cmpi ne, %68, %c0_i32_42 : i32
    scf.if %69 {
      %c0_43 = arith.constant 0 : index
      %c0_44 = arith.constant 0 : index
      %70 = vector.load %arg15[%c0_43, %c0_44] : memref<16x32xf32, #tpu.memory_space<vmem>>, vector<16x32xf32>
      %cst_45 = arith.constant dense<0.000000e+00> : vector<16xf32>
      %71 = vector.multi_reduction <add>, %70, %cst_45 [1] : vector<16x32xf32> to vector<16xf32>
      %72 = vector.shape_cast %71 : vector<16xf32> to vector<16x1xf32>
      %cst_46 = arith.constant 3.200000e+01 : f32
      %73 = vector.broadcast %cst_46 : f32 to vector<16x1xf32>
      %74 = arith.divf %72, %73 : vector<16x1xf32>
      %75 = vector.broadcast %74 : vector<16x1xf32> to vector<16x32xf32>
      %76 = arith.subf %70, %75 : vector<16x32xf32>
      %77 = arith.mulf %76, %76 : vector<16x32xf32>
      %cst_47 = arith.constant dense<0.000000e+00> : vector<16xf32>
      %78 = vector.multi_reduction <add>, %77, %cst_47 [1] : vector<16x32xf32> to vector<16xf32>
      %79 = vector.shape_cast %78 : vector<16xf32> to vector<16x1xf32>
      %cst_48 = arith.constant 3.200000e+01 : f32
      %80 = vector.broadcast %cst_48 : f32 to vector<16x1xf32>
      %81 = arith.divf %79, %80 : vector<16x1xf32>
      %cst_49 = arith.constant 9.99999996E-13 : f32
      %82 = vector.broadcast %cst_49 : f32 to vector<16x1xf32>
      %83 = arith.addf %81, %82 : vector<16x1xf32>
      %84 = math.rsqrt %83 : vector<16x1xf32>
      %85 = vector.broadcast %84 : vector<16x1xf32> to vector<16x32xf32>
      %86 = arith.mulf %76, %85 : vector<16x32xf32>
      %c0_50 = arith.constant 0 : index
      %c0_51 = arith.constant 0 : index
      %87 = vector.load %arg11[%c0_50, %c0_51] : memref<1x32xf32, #tpu.memory_space<vmem>>, vector<1x32xf32>
      %88 = vector.broadcast %87 : vector<1x32xf32> to vector<16x32xf32>
      %89 = arith.mulf %86, %88 : vector<16x32xf32>
      %c0_52 = arith.constant 0 : index
      %c0_53 = arith.constant 0 : index
      %90 = vector.load %arg12[%c0_52, %c0_53] : memref<1x32xf32, #tpu.memory_space<vmem>>, vector<1x32xf32>
      %91 = vector.broadcast %90 : vector<1x32xf32> to vector<16x32xf32>
      %92 = arith.addf %89, %91 : vector<16x32xf32>
      %c0_54 = arith.constant 0 : index
      %c0_55 = arith.constant 0 : index
      %93 = vector.load %arg13[%c0_54, %c0_55] : memref<16x32xf32, #tpu.memory_space<vmem>>, vector<16x32xf32>
      tpu.vector_store %arg13[%c0_54, %c0_55], %92 {strides = array<i32>} : memref<16x32xf32, #tpu.memory_space<vmem>>, vector<16x32xf32>,
    } else {
    }
    return
  }
  func.func @transform_0(%arg0: i32) -> (i32, i32) {
    %c0_i32 = arith.constant 0 : i32
    %c0_i32_0 = arith.constant 0 : i32
    %c0_i32_1 = arith.constant 0 : i32
    return %c0_i32, %c0_i32_0 : i32, i32
  }
  func.func @transform_1(%arg0: i32) -> (i32, i32, i32) {
    %c0_i32 = arith.constant 0 : i32
    %c0_i32_0 = arith.constant 0 : i32
    %c0_i32_1 = arith.constant 0 : i32
    %c0_i32_2 = arith.constant 0 : i32
    return %c0_i32, %c0_i32_0, %c0_i32_1 : i32, i32, i32
  }
  func.func @transform_2(%arg0: i32) -> (i32, i32, i32) {
    %c0_i32 = arith.constant 0 : i32
    %c0_i32_0 = arith.constant 0 : i32
    %c0_i32_1 = arith.constant 0 : i32
    return %arg0, %c0_i32, %c0_i32_0 : i32, i32, i32
  }
  func.func @transform_3(%arg0: i32) -> (i32, i32, i32) {
    %c0_i32 = arith.constant 0 : i32
    %c0_i32_0 = arith.constant 0 : i32
    %c0_i32_1 = arith.constant 0 : i32
    return %arg0, %c0_i32, %c0_i32_0 : i32, i32, i32
  }
  func.func @transform_4(%arg0: i32) -> (i32, i32, i32) {
    %c0_i32 = arith.constant 0 : i32
    %c0_i32_0 = arith.constant 0 : i32
    %c0_i32_1 = arith.constant 0 : i32
    return %arg0, %c0_i32, %c0_i32_0 : i32, i32, i32
  }
  func.func @transform_5(%arg0: i32) -> (i32, i32, i32) {
    %c0_i32 = arith.constant 0 : i32
    %c0_i32_0 = arith.constant 0 : i32
    %c0_i32_1 = arith.constant 0 : i32
    return %arg0, %c0_i32, %c0_i32_0 : i32, i32, i32
  }
  func.func @transform_6(%arg0: i32) -> (i32, i32, i32) {
    %c0_i32 = arith.constant 0 : i32
    %c0_i32_0 = arith.constant 0 : i32
    %c0_i32_1 = arith.constant 0 : i32
    return %arg0, %c0_i32, %c0_i32_0 : i32, i32, i32
  }
  func.func @transform_7(%arg0: i32) -> (i32, i32, i32) {
    %c0_i32 = arith.constant 0 : i32
    %c0_i32_0 = arith.constant 0 : i32
    %c0_i32_1 = arith.constant 0 : i32
    return %arg0, %c0_i32, %c0_i32_0 : i32, i32, i32
  }
  func.func @transform_8(%arg0: i32) -> (i32, i32, i32) {
    %c0_i32 = arith.constant 0 : i32
    %c0_i32_0 = arith.constant 0 : i32
    %c0_i32_1 = arith.constant 0 : i32
    return %arg0, %c0_i32, %c0_i32_0 : i32, i32, i32
  }
  func.func @transform_9(%arg0: i32) -> (i32, i32) {
    %c0_i32 = arith.constant 0 : i32
    %c0_i32_0 = arith.constant 0 : i32
    %c0_i32_1 = arith.constant 0 : i32
    return %c0_i32, %c0_i32_0 : i32, i32
  }
  func.func @transform_10(%arg0: i32) -> (i32, i32) {
    %c0_i32 = arith.constant 0 : i32
    %c0_i32_0 = arith.constant 0 : i32
    %c0_i32_1 = arith.constant 0 : i32
    return %c0_i32, %c0_i32_0 : i32, i32
  }
  func.func @transform_11(%arg0: i32) -> (i32, i32) {
    %c0_i32 = arith.constant 0 : i32
    %c0_i32_0 = arith.constant 0 : i32
    %c0_i32_1 = arith.constant 0 : i32
    return %c0_i32, %c0_i32_0 : i32, i32
  }
  func.func @transform_12(%arg0: i32) -> (i32, i32) {
    %c0_i32 = arith.constant 0 : i32
    %c0_i32_0 = arith.constant 0 : i32
    %c0_i32_1 = arith.constant 0 : i32
    return %c0_i32, %c0_i32_0 : i32, i32
  }
  func.func @transform_13(%arg0: i32) -> (i32, i32, i32, i32) {
    %c0_i32 = arith.constant 0 : i32
    %c0_i32_0 = arith.constant 0 : i32
    %c0_i32_1 = arith.constant 0 : i32
    %c0_i32_2 = arith.constant 0 : i32
    return %arg0, %c0_i32, %c0_i32_0, %c0_i32_1 : i32, i32, i32, i32
  }
}

</mosaic_0001>

<llo_original>
// kernel: tpu_custom_call.1
$region0: #{tpu_custom_call.1}
  #allocation0 [shape = 'u32[]', space=smem, size = 0x4, offset = 0x4, fixed_abs, tag = 'smem constant byte address 0x4 - core index']
  #allocation1 [shape = 'u32[144,128]{1,0:T(1,128)}', space=vmem, size = 0x12000, scoped, tag = 'internal scratch']
  #allocation2 [shape = 'f32[16,32]{1,0:T(8,128)}', space=vmem, size = 0x2000, scoped, tag = 'scratch operand']
  %s0 = inlined_call_operand.vmem [shape: f32[16,32], index: 0, kind: input, shape index: {}]
  %s1 = inlined_call_operand.vmem [shape: f32[2,1,8], index: 1, kind: input, shape index: {}]
  %s2 = inlined_call_operand.vmem [shape: f32[4,32,8], index: 2, kind: input, shape index: {}]
  %s3 = inlined_call_operand.vmem [shape: f32[4,32,8], index: 3, kind: input, shape index: {}]
  %s4 = inlined_call_operand.vmem [shape: f32[4,32,8], index: 4, kind: input, shape index: {}]
  %s5 = inlined_call_operand.vmem [shape: f32[4,1,8], index: 5, kind: input, shape index: {}]
  %s6 = inlined_call_operand.vmem [shape: f32[4,1,8], index: 6, kind: input, shape index: {}]
  %s7 = inlined_call_operand.vmem [shape: f32[4,1,8], index: 7, kind: input, shape index: {}]
  %s8 = inlined_call_operand.vmem [shape: f32[4,8,32], index: 8, kind: input, shape index: {}]
  %s9 = inlined_call_operand.vmem [shape: f32[1,32], index: 9, kind: input, shape index: {}]
  %s10 = inlined_call_operand.vmem [shape: f32[1,32], index: 10, kind: input, shape index: {}]
  %s11 = inlined_call_operand.vmem [shape: f32[1,32], index: 11, kind: input, shape index: {}]
  %s12 = inlined_call_operand.hbm [shape: f32[16,32], index: 12, kind: output, shape index: {0}]
  %s13 = inlined_call_operand.hbm [shape: f32[4,2,8,8], index: 13, kind: output, shape index: {1}]
  %14 = xla_tuple %s12, %s13
  %s15 = sld [smem:[#allocation0]]
  $region97: #{tpu_custom_call.1} parent=0
    _
  %s17 = ssub.s32 1, %s15
  %s18 = scalar_select 0, %s17, %s15
  $region1: #{tpu_custom_call.1} parent=0
    #allocation3 [shape = 'u8[8192]{0}', space=vmem, size = 0x2000, scoped, tag = 'output window, operand 0, single buffered']
    #allocation4 [shape = 's32[2]{0}', space=sflag, size = 0x8, scoped, tag = 'scoped memory for tpu_custom_call.1']
    #allocation5 [shape = 'u8[16384]{0}', space=vmem, size = 0x4000, scoped, tag = 'output window, operand 1']
    #allocation6 [shape = 's32[2]{0}', space=sflag, size = 0x8, scoped, tag = 'scoped memory for tpu_custom_call.1']
    %19 = vsyncpa [#allocation4], 0
    %20 = vsyncpa [#allocation6], 0
    %s21 = scalar_lea.sflag [#allocation6], 1
    %22 = vsyncpa %s21, 0
    loop: start=0, step=1, limit=6
    $region2: #{tpu_custom_call.1} parent=1 // loop_pre_header
      _
    $region3: #{tpu_custom_call.1} parent=1 // loop_header
      %s24 = sphi 0, %s28
      %p25 = scmp.ge.s32.totalorder %s24, 6
      %s32 = sphi 0, %s32
      %s34 = sphi 0, %s32
      %s35 = sphi 0, %s34
      %s49 = sphi 0, %s35
      %s53 = sphi 0, %s53
      %s55 = sphi 0, %s53
      %s56 = sphi 0, %s55
      %s70 = sphi 0, %s56
      %s76 = sphi 0, %s78
      %s79 = sphi 0, %s76
      %s80 = sphi 0, %s79
      %s96 = sphi 0, %s80
      %s102 = sphi 0, %s104
      %s105 = sphi 0, %s102
      %s106 = sphi 0, %s105
      %s122 = sphi 0, %s106
      %s128 = sphi 0, %s130
      %s131 = sphi 0, %s128
      %s132 = sphi 0, %s131
      %s148 = sphi 0, %s132
      %s154 = sphi 0, %s156
      %s157 = sphi 0, %s154
      %s158 = sphi 0, %s157
      %s174 = sphi 0, %s158
      %s180 = sphi 0, %s182
      %s183 = sphi 0, %s180
      %s184 = sphi 0, %s183
      %s200 = sphi 0, %s184
      %s206 = sphi 0, %s208
      %s209 = sphi 0, %s206
      %s210 = sphi 0, %s209
      %s226 = sphi 0, %s210
      %s232 = sphi 0, %s234
      %s235 = sphi 0, %s232
      %s236 = sphi 0, %s235
      %s252 = sphi 0, %s236
      %s256 = sphi 0, %s256
      %s258 = sphi 0, %s256
      %s259 = sphi 0, %s258
      %s273 = sphi 0, %s259
      %s277 = sphi 0, %s277
      %s279 = sphi 0, %s277
      %s280 = sphi 0, %s279
      %s294 = sphi 0, %s280
      %s298 = sphi 0, %s298
      %s300 = sphi 0, %s298
      %s301 = sphi 0, %s300
      %s315 = sphi 0, %s301
      %s319 = sphi 0, %s319
      %s321 = sphi 0, %s319
      %s322 = sphi 0, %s321
      %s336 = sphi 0, %s322
      %s342 = sphi 0, %s344
      %s345 = sphi 0, %s342
      %s346 = sphi 0, %s345
      %s362 = sphi 0, %s346
    $region4: #{tpu_custom_call.1} parent=1 // loop_header_branch
      %27 = sbr.rel (%p25) target = $region8
    $region5: #{tpu_custom_call.1} parent=1 // loop_body
      %s29 = ssub.s32 %s24, 1
      %s30 = ssub.s32 %s24, 2
      %s31 = sadd.s32 %s24, 1
      %s33 = sadd.s32 %s32, 1
      %p36 = scmp.eq.s32.totalorder %s24, 3
      %p37 = scmp.ne.s32.totalorder %s32, %s34
      %p38 = scmp.eq.s32.totalorder %s24, 0
      %p39 = por %p37, %p38
      %p40 = scmp.ne.s32.totalorder %s32, %s34
      %p41 = scmp.eq.s32.totalorder %s29, 3
      %p42 = por %p40, %p41
      %p43 = scmp.ne.s32.totalorder %s34, %s35
      %p44 = scmp.eq.s32.totalorder %s29, 0
      %p45 = por %p43, %p44
      %p46 = scmp.ne.s32.totalorder %s34, %s35
      %p47 = scmp.eq.s32.totalorder %s30, 3
      %p48 = por %p46, %p47
      %p50 = scmp.ne.s32.totalorder %s35, %s49
      %p51 = scmp.eq.s32.totalorder %s30, 0
      %p52 = por %p50, %p51
      %s54 = sadd.s32 %s53, 1
      %p57 = scmp.eq.s32.totalorder %s24, 3
      %p58 = scmp.ne.s32.totalorder %s53, %s55
      %p59 = scmp.eq.s32.totalorder %s24, 0
      %p60 = por %p58, %p59
      %p61 = scmp.ne.s32.totalorder %s53, %s55
      %p62 = scmp.eq.s32.totalorder %s29, 3
      %p63 = por %p61, %p62
      %p64 = scmp.ne.s32.totalorder %s55, %s56
      %p65 = scmp.eq.s32.totalorder %s29, 0
      %p66 = por %p64, %p65
      %p67 = scmp.ne.s32.totalorder %s55, %s56
      %p68 = scmp.eq.s32.totalorder %s30, 3
      %p69 = por %p67, %p68
      %p71 = scmp.ne.s32.totalorder %s56, %s70
      %p72 = scmp.eq.s32.totalorder %s30, 0
      %p73 = por %p71, %p72
      %s74 = ssub.s32 %s24, %s31
      %p75 = scmp.eq.s32.totalorder %s74, 0
      %s77 = sadd.s32 %s76, 1
      %s78 = scalar_select %p75, %s76, %s77
      %p81 = pneg %p75
      %p82 = scmp.eq.s32.totalorder %s24, 3
      %p83 = por %p81, %p82
      %p84 = scmp.ne.s32.totalorder %s76, %s79
      %p85 = scmp.eq.s32.totalorder %s24, 0
      %p86 = por %p84, %p85
      %p87 = scmp.ne.s32.totalorder %s76, %s79
      %p88 = scmp.eq.s32.totalorder %s29, 3
      %p89 = por %p87, %p88
      %p90 = scmp.ne.s32.totalorder %s79, %s80
      %p91 = scmp.eq.s32.totalorder %s29, 0
      %p92 = por %p90, %p91
      %p93 = scmp.ne.s32.totalorder %s79, %s80
      %p94 = scmp.eq.s32.totalorder %s30, 3
      %p95 = por %p93, %p94
      %p97 = scmp.ne.s32.totalorder %s80, %s96
      %p98 = scmp.eq.s32.totalorder %s30, 0
      %p99 = por %p97, %p98
      %s100 = ssub.s32 %s24, %s31
      %p101 = scmp.eq.s32.totalorder %s100, 0
      %s103 = sadd.s32 %s102, 1
      %s104 = scalar_select %p101, %s102, %s103
      %p107 = pneg %p101
      %p108 = scmp.eq.s32.totalorder %s24, 3
      %p109 = por %p107, %p108
      %p110 = scmp.ne.s32.totalorder %s102, %s105
      %p111 = scmp.eq.s32.totalorder %s24, 0
      %p112 = por %p110, %p111
      %p113 = scmp.ne.s32.totalorder %s102, %s105
      %p114 = scmp.eq.s32.totalorder %s29, 3
      %p115 = por %p113, %p114
      %p116 = scmp.ne.s32.totalorder %s105, %s106
      %p117 = scmp.eq.s32.totalorder %s29, 0
      %p118 = por %p116, %p117
      %p119 = scmp.ne.s32.totalorder %s105, %s106
      %p120 = scmp.eq.s32.totalorder %s30, 3
      %p121 = por %p119, %p120
      %p123 = scmp.ne.s32.totalorder %s106, %s122
      %p124 = scmp.eq.s32.totalorder %s30, 0
      %p125 = por %p123, %p124
      %s126 = ssub.s32 %s24, %s31
      %p127 = scmp.eq.s32.totalorder %s126, 0
      %s129 = sadd.s32 %s128, 1
      %s130 = scalar_select %p127, %s128, %s129
      %p133 = pneg %p127
      %p134 = scmp.eq.s32.totalorder %s24, 3
      %p135 = por %p133, %p134
      %p136 = scmp.ne.s32.totalorder %s128, %s131
      %p137 = scmp.eq.s32.totalorder %s24, 0
      %p138 = por %p136, %p137
      %p139 = scmp.ne.s32.totalorder %s128, %s131
      %p140 = scmp.eq.s32.totalorder %s29, 3
      %p141 = por %p139, %p140
      %p142 = scmp.ne.s32.totalorder %s131, %s132
      %p143 = scmp.eq.s32.totalorder %s29, 0
      %p144 = por %p142, %p143
      %p145 = scmp.ne.s32.totalorder %s131, %s132
      %p146 = scmp.eq.s32.totalorder %s30, 3
      %p147 = por %p145, %p146
      %p149 = scmp.ne.s32.totalorder %s132, %s148
      %p150 = scmp.eq.s32.totalorder %s30, 0
      %p151 = por %p149, %p150
      %s152 = ssub.s32 %s24, %s31
      %p153 = scmp.eq.s32.totalorder %s152, 0
      %s155 = sadd.s32 %s154, 1
      %s156 = scalar_select %p153, %s154, %s155
      %p159 = pneg %p153
      %p160 = scmp.eq.s32.totalorder %s24, 3
      %p161 = por %p159, %p160
      %p162 = scmp.ne.s32.totalorder %s154, %s157
      %p163 = scmp.eq.s32.totalorder %s24, 0
      %p164 = por %p162, %p163
      %p165 = scmp.ne.s32.totalorder %s154, %s157
      %p166 = scmp.eq.s32.totalorder %s29, 3
      %p167 = por %p165, %p166
      %p168 = scmp.ne.s32.totalorder %s157, %s158
      %p169 = scmp.eq.s32.totalorder %s29, 0
      %p170 = por %p168, %p169
      %p171 = scmp.ne.s32.totalorder %s157, %s158
      %p172 = scmp.eq.s32.totalorder %s30, 3
      %p173 = por %p171, %p172
      %p175 = scmp.ne.s32.totalorder %s158, %s174
      %p176 = scmp.eq.s32.totalorder %s30, 0
      %p177 = por %p175, %p176
      %s178 = ssub.s32 %s24, %s31
      %p179 = scmp.eq.s32.totalorder %s178, 0
      %s181 = sadd.s32 %s180, 1
      %s182 = scalar_select %p179, %s180, %s181
      %p185 = pneg %p179
      %p186 = scmp.eq.s32.totalorder %s24, 3
      %p187 = por %p185, %p186
      %p188 = scmp.ne.s32.totalorder %s180, %s183
      %p189 = scmp.eq.s32.totalorder %s24, 0
      %p190 = por %p188, %p189
      %p191 = scmp.ne.s32.totalorder %s180, %s183
      %p192 = scmp.eq.s32.totalorder %s29, 3
      %p193 = por %p191, %p192
      %p194 = scmp.ne.s32.totalorder %s183, %s184
      %p195 = scmp.eq.s32.totalorder %s29, 0
      %p196 = por %p194, %p195
      %p197 = scmp.ne.s32.totalorder %s183, %s184
      %p198 = scmp.eq.s32.totalorder %s30, 3
      %p199 = por %p197, %p198
      %p201 = scmp.ne.s32.totalorder %s184, %s200
      %p202 = scmp.eq.s32.totalorder %s30, 0
      %p203 = por %p201, %p202
      %s204 = ssub.s32 %s24, %s31
      %p205 = scmp.eq.s32.totalorder %s204, 0
      %s207 = sadd.s32 %s206, 1
      %s208 = scalar_select %p205, %s206, %s207
      %p211 = pneg %p205
      %p212 = scmp.eq.s32.totalorder %s24, 3
      %p213 = por %p211, %p212
      %p214 = scmp.ne.s32.totalorder %s206, %s209
      %p215 = scmp.eq.s32.totalorder %s24, 0
      %p216 = por %p214, %p215
      %p217 = scmp.ne.s32.totalorder %s206, %s209
      %p218 = scmp.eq.s32.totalorder %s29, 3
      %p219 = por %p217, %p218
      %p220 = scmp.ne.s32.totalorder %s209, %s210
      %p221 = scmp.eq.s32.totalorder %s29, 0
      %p222 = por %p220, %p221
      %p223 = scmp.ne.s32.totalorder %s209, %s210
      %p224 = scmp.eq.s32.totalorder %s30, 3
      %p225 = por %p223, %p224
      %p227 = scmp.ne.s32.totalorder %s210, %s226
      %p228 = scmp.eq.s32.totalorder %s30, 0
      %p229 = por %p227, %p228
      %s230 = ssub.s32 %s24, %s31
      %p231 = scmp.eq.s32.totalorder %s230, 0
      %s233 = sadd.s32 %s232, 1
      %s234 = scalar_select %p231, %s232, %s233
      %p237 = pneg %p231
      %p238 = scmp.eq.s32.totalorder %s24, 3
      %p239 = por %p237, %p238
      %p240 = scmp.ne.s32.totalorder %s232, %s235
      %p241 = scmp.eq.s32.totalorder %s24, 0
      %p242 = por %p240, %p241
      %p243 = scmp.ne.s32.totalorder %s232, %s235
      %p244 = scmp.eq.s32.totalorder %s29, 3
      %p245 = por %p243, %p244
      %p246 = scmp.ne.s32.totalorder %s235, %s236
      %p247 = scmp.eq.s32.totalorder %s29, 0
      %p248 = por %p246, %p247
      %p249 = scmp.ne.s32.totalorder %s235, %s236
      %p250 = scmp.eq.s32.totalorder %s30, 3
      %p251 = por %p249, %p250
      %p253 = scmp.ne.s32.totalorder %s236, %s252
      %p254 = scmp.eq.s32.totalorder %s30, 0
      %p255 = por %p253, %p254
      %s257 = sadd.s32 %s256, 1
      %p260 = scmp.eq.s32.totalorder %s24, 3
      %p261 = scmp.ne.s32.totalorder %s256, %s258
      %p262 = scmp.eq.s32.totalorder %s24, 0
      %p263 = por %p261, %p262
      %p264 = scmp.ne.s32.totalorder %s256, %s258
      %p265 = scmp.eq.s32.totalorder %s29, 3
      %p266 = por %p264, %p265
      %p267 = scmp.ne.s32.totalorder %s258, %s259
      %p268 = scmp.eq.s32.totalorder %s29, 0
      %p269 = por %p267, %p268
      %p270 = scmp.ne.s32.totalorder %s258, %s259
      %p271 = scmp.eq.s32.totalorder %s30, 3
      %p272 = por %p270, %p271
      %p274 = scmp.ne.s32.totalorder %s259, %s273
      %p275 = scmp.eq.s32.totalorder %s30, 0
      %p276 = por %p274, %p275
      %s278 = sadd.s32 %s277, 1
      %p281 = scmp.eq.s32.totalorder %s24, 3
      %p282 = scmp.ne.s32.totalorder %s277, %s279
      %p283 = scmp.eq.s32.totalorder %s24, 0
      %p284 = por %p282, %p283
      %p285 = scmp.ne.s32.totalorder %s277, %s279
      %p286 = scmp.eq.s32.totalorder %s29, 3
      %p287 = por %p285, %p286
      %p288 = scmp.ne.s32.totalorder %s279, %s280
      %p289 = scmp.eq.s32.totalorder %s29, 0
      %p290 = por %p288, %p289
      %p291 = scmp.ne.s32.totalorder %s279, %s280
      %p292 = scmp.eq.s32.totalorder %s30, 3
      %p293 = por %p291, %p292
      %p295 = scmp.ne.s32.totalorder %s280, %s294
      %p296 = scmp.eq.s32.totalorder %s30, 0
      %p297 = por %p295, %p296
      %s299 = sadd.s32 %s298, 1
      %p302 = scmp.eq.s32.totalorder %s24, 3
      %p303 = scmp.ne.s32.totalorder %s298, %s300
      %p304 = scmp.eq.s32.totalorder %s24, 0
      %p305 = por %p303, %p304
      %p306 = scmp.ne.s32.totalorder %s298, %s300
      %p307 = scmp.eq.s32.totalorder %s29, 3
      %p308 = por %p306, %p307
      %p309 = scmp.ne.s32.totalorder %s300, %s301
      %p310 = scmp.eq.s32.totalorder %s29, 0
      %p311 = por %p309, %p310
      %p312 = scmp.ne.s32.totalorder %s300, %s301
      %p313 = scmp.eq.s32.totalorder %s30, 3
      %p314 = por %p312, %p313
      %p316 = scmp.ne.s32.totalorder %s301, %s315
      %p317 = scmp.eq.s32.totalorder %s30, 0
      %p318 = por %p316, %p317
      %s320 = sadd.s32 %s319, 1
      %p323 = scmp.eq.s32.totalorder %s24, 3
      %p324 = scmp.ne.s32.totalorder %s319, %s321
      %p325 = scmp.eq.s32.totalorder %s24, 0
      %p326 = por %p324, %p325
      %p327 = scmp.ne.s32.totalorder %s319, %s321
      %p328 = scmp.eq.s32.totalorder %s29, 3
      %p329 = por %p327, %p328
      %p330 = scmp.ne.s32.totalorder %s321, %s322
      %p331 = scmp.eq.s32.totalorder %s29, 0
      %p332 = por %p330, %p331
      %p333 = scmp.ne.s32.totalorder %s321, %s322
      %p334 = scmp.eq.s32.totalorder %s30, 3
      %p335 = por %p333, %p334
      %p337 = scmp.ne.s32.totalorder %s322, %s336
      %p338 = scmp.eq.s32.totalorder %s30, 0
      %p339 = por %p337, %p338
      %s340 = ssub.s32 %s24, %s31
      %p341 = scmp.eq.s32.totalorder %s340, 0
      %s343 = sadd.s32 %s342, 1
      %s344 = scalar_select %p341, %s342, %s343
      %p347 = pneg %p341
      %p348 = scmp.eq.s32.totalorder %s24, 3
      %p349 = por %p347, %p348
      %p350 = scmp.ne.s32.totalorder %s342, %s345
      %p351 = scmp.eq.s32.totalorder %s24, 0
      %p352 = por %p350, %p351
      %p353 = scmp.ne.s32.totalorder %s342, %s345
      %p354 = scmp.eq.s32.totalorder %s29, 3
      %p355 = por %p353, %p354
      %p356 = scmp.ne.s32.totalorder %s345, %s346
      %p357 = scmp.eq.s32.totalorder %s29, 0
      %p358 = por %p356, %p357
      %p359 = scmp.ne.s32.totalorder %s345, %s346
      %p360 = scmp.eq.s32.totalorder %s30, 3
      %p361 = por %p359, %p360
      %p363 = scmp.ne.s32.totalorder %s346, %s362
      %p364 = scmp.eq.s32.totalorder %s30, 0
      %p365 = por %p363, %p364
      %p366 = scmp.le.s32.totalorder 1, %s24
      %p367 = scmp.lt.s32.totalorder %s24, 5
      %p368 = pnand %p366, %p367
      %p369 = pneg %p368
      // Predicated region
      $region9: #{tpu_custom_call.1} parent=5 // pred_check
        _
      $region10: #{tpu_custom_call.1} parent=5 // pred_check_branch
        %371 = sbr.rel (%p368) target = $region12
      $region11: #{tpu_custom_call.1} parent=5 // pred_region
        %s372 = ssub.s32 %s24, 1
        // Predicated region
        $region13: #{tpu_custom_call.1} parent=11 // pred_check
          %p373 = pneg %p45
        $region14: #{tpu_custom_call.1} parent=11 // pred_check_branch
          %375 = sbr.rel (%p373) target = $region16
        $region15: #{tpu_custom_call.1} parent=11 // pred_region
          _
        $region16: #{tpu_custom_call.1} parent=11 // pred_fallthru
          _
        // Predicated region
        $region17: #{tpu_custom_call.1} parent=11 // pred_check
          %p376 = pneg %p66
        $region18: #{tpu_custom_call.1} parent=11 // pred_check_branch
          %378 = sbr.rel (%p376) target = $region20
        $region19: #{tpu_custom_call.1} parent=11 // pred_region
          _
        $region20: #{tpu_custom_call.1} parent=11 // pred_fallthru
          _
        // Predicated region
        $region21: #{tpu_custom_call.1} parent=11 // pred_check
          %p379 = pneg %p269
        $region22: #{tpu_custom_call.1} parent=11 // pred_check_branch
          %381 = sbr.rel (%p379) target = $region24
        $region23: #{tpu_custom_call.1} parent=11 // pred_region
          _
        $region24: #{tpu_custom_call.1} parent=11 // pred_fallthru
          _
        // Predicated region
        $region25: #{tpu_custom_call.1} parent=11 // pred_check
          %p382 = pneg %p290
        $region26: #{tpu_custom_call.1} parent=11 // pred_check_branch
          %384 = sbr.rel (%p382) target = $region28
        $region27: #{tpu_custom_call.1} parent=11 // pred_region
          _
        $region28: #{tpu_custom_call.1} parent=11 // pred_fallthru
          _
        // Predicated region
        $region29: #{tpu_custom_call.1} parent=11 // pred_check
          %p385 = pneg %p311
        $region30: #{tpu_custom_call.1} parent=11 // pred_check_branch
          %387 = sbr.rel (%p385) target = $region32
        $region31: #{tpu_custom_call.1} parent=11 // pred_region
          _
        $region32: #{tpu_custom_call.1} parent=11 // pred_fallthru
          _
      $region12: #{tpu_custom_call.1} parent=5 // pred_fallthru
        _
      %p388 = scmp.lt.s32.totalorder %s24, 4
      // Predicated region
      $region33: #{tpu_custom_call.1} parent=5 // pred_check
        %p389 = pneg %p388
      $region34: #{tpu_custom_call.1} parent=5 // pred_check_branch
        %391 = sbr.rel (%p389) target = $region36
      $region35: #{tpu_custom_call.1} parent=5 // pred_region
        // Predicated region
        $region37: #{tpu_custom_call.1} parent=35 // pred_check
          %p392 = pneg %p86
        $region38: #{tpu_custom_call.1} parent=35 // pred_check_branch
          %394 = sbr.rel (%p392) target = $region40
        $region39: #{tpu_custom_call.1} parent=35 // pred_region
          %p395 = scmp.lt.s32.totalorder %s24, 3
          %s396 = scalar_select %p395, %s24, 3
          %s397 = smul.addr %s396, 4
          %s398 = smul.addr %s397, 8
          %s399 = scalar_lea.vmem %s2, %s398
        $region40: #{tpu_custom_call.1} parent=35 // pred_fallthru
          _
        // Predicated region
        $region41: #{tpu_custom_call.1} parent=35 // pred_check
          %p400 = pneg %p112
        $region42: #{tpu_custom_call.1} parent=35 // pred_check_branch
          %402 = sbr.rel (%p400) target = $region44
        $region43: #{tpu_custom_call.1} parent=35 // pred_region
          %p403 = scmp.lt.s32.totalorder %s24, 3
          %s404 = scalar_select %p403, %s24, 3
          %s405 = smul.addr %s404, 4
          %s406 = smul.addr %s405, 8
          %s407 = scalar_lea.vmem %s3, %s406
        $region44: #{tpu_custom_call.1} parent=35 // pred_fallthru
          _
        // Predicated region
        $region45: #{tpu_custom_call.1} parent=35 // pred_check
          %p408 = pneg %p138
        $region46: #{tpu_custom_call.1} parent=35 // pred_check_branch
          %410 = sbr.rel (%p408) target = $region48
        $region47: #{tpu_custom_call.1} parent=35 // pred_region
          %p411 = scmp.lt.s32.totalorder %s24, 3
          %s412 = scalar_select %p411, %s24, 3
          %s413 = smul.addr %s412, 4
          %s414 = smul.addr %s413, 8
          %s415 = scalar_lea.vmem %s4, %s414
        $region48: #{tpu_custom_call.1} parent=35 // pred_fallthru
          _
        // Predicated region
        $region49: #{tpu_custom_call.1} parent=35 // pred_check
          %p416 = pneg %p164
        $region50: #{tpu_custom_call.1} parent=35 // pred_check_branch
          %418 = sbr.rel (%p416) target = $region52
        $region51: #{tpu_custom_call.1} parent=35 // pred_region
          %p419 = scmp.lt.s32.totalorder %s24, 3
          %s420 = scalar_select %p419, %s24, 3
          %s421 = scalar_lea.vmem %s5, %s420
        $region52: #{tpu_custom_call.1} parent=35 // pred_fallthru
          _
        // Predicated region
        $region53: #{tpu_custom_call.1} parent=35 // pred_check
          %p422 = pneg %p190
        $region54: #{tpu_custom_call.1} parent=35 // pred_check_branch
          %424 = sbr.rel (%p422) target = $region56
        $region55: #{tpu_custom_call.1} parent=35 // pred_region
          %p425 = scmp.lt.s32.totalorder %s24, 3
          %s426 = scalar_select %p425, %s24, 3
          %s427 = scalar_lea.vmem %s6, %s426
        $region56: #{tpu_custom_call.1} parent=35 // pred_fallthru
          _
        // Predicated region
        $region57: #{tpu_custom_call.1} parent=35 // pred_check
          %p428 = pneg %p216
        $region58: #{tpu_custom_call.1} parent=35 // pred_check_branch
          %430 = sbr.rel (%p428) target = $region60
        $region59: #{tpu_custom_call.1} parent=35 // pred_region
          %p431 = scmp.lt.s32.totalorder %s24, 3
          %s432 = scalar_select %p431, %s24, 3
          %s433 = scalar_lea.vmem %s7, %s432
        $region60: #{tpu_custom_call.1} parent=35 // pred_fallthru
          _
        // Predicated region
        $region61: #{tpu_custom_call.1} parent=35 // pred_check
          %p434 = pneg %p242
        $region62: #{tpu_custom_call.1} parent=35 // pred_check_branch
          %436 = sbr.rel (%p434) target = $region64
        $region63: #{tpu_custom_call.1} parent=35 // pred_region
          %p437 = scmp.lt.s32.totalorder %s24, 3
          %s438 = scalar_select %p437, %s24, 3
          %s439 = smul.addr %s438, 8
          %s440 = scalar_lea.vmem %s8, %s439
        $region64: #{tpu_custom_call.1} parent=35 // pred_fallthru
          _
      $region36: #{tpu_custom_call.1} parent=5 // pred_fallthru
        _
      %p441 = scmp.le.s32.totalorder 1, %s24
      %p442 = scmp.lt.s32.totalorder %s24, 5
      %p443 = pnand %p441, %p442
      %p444 = pneg %p443
      // Predicated region
      $region65: #{tpu_custom_call.1} parent=5 // pred_check
        _
      $region66: #{tpu_custom_call.1} parent=5 // pred_check_branch
        %446 = sbr.rel (%p443) target = $region68
      $region67: #{tpu_custom_call.1} parent=5 // pred_region
        %s447 = ssub.s32 %s24, 1
        %p448 = pneg %p45
        %p449 = pneg %p42
        %p450 = pneg %p66
        %p451 = pneg %p63
        %p452 = scmp.lt.s32.totalorder %s29, 3
        %s453 = scalar_select %p452, %s29, 3
        %s454 = smul.addr %s453, 4
        %s455 = smul.addr %s454, 8
        %s456 = scalar_lea.vmem %s2, %s455
        %p457 = pneg %p92
        %p458 = pneg %p89
        %p459 = scmp.lt.s32.totalorder %s29, 3
        %s460 = scalar_select %p459, %s29, 3
        %s461 = smul.addr %s460, 4
        %s462 = smul.addr %s461, 8
        %s463 = scalar_lea.vmem %s3, %s462
        %p464 = pneg %p118
        %p465 = pneg %p115
        %p466 = scmp.lt.s32.totalorder %s29, 3
        %s467 = scalar_select %p466, %s29, 3
        %s468 = smul.addr %s467, 4
        %s469 = smul.addr %s468, 8
        %s470 = scalar_lea.vmem %s4, %s469
        %p471 = pneg %p144
        %p472 = pneg %p141
        %p473 = scmp.lt.s32.totalorder %s29, 3
        %s474 = scalar_select %p473, %s29, 3
        %s475 = scalar_lea.vmem %s5, %s474
        %p476 = pneg %p170
        %p477 = pneg %p167
        %p478 = scmp.lt.s32.totalorder %s29, 3
        %s479 = scalar_select %p478, %s29, 3
        %s480 = scalar_lea.vmem %s6, %s479
        %p481 = pneg %p196
        %p482 = pneg %p193
        %p483 = scmp.lt.s32.totalorder %s29, 3
        %s484 = scalar_select %p483, %s29, 3
        %s485 = scalar_lea.vmem %s7, %s484
        %p486 = pneg %p222
        %p487 = pneg %p219
        %p488 = scmp.lt.s32.totalorder %s29, 3
        %s489 = scalar_select %p488, %s29, 3
        %s490 = smul.addr %s489, 8
        %s491 = scalar_lea.vmem %s8, %s490
        %p492 = pneg %p248
        %p493 = pneg %p245
        %p494 = pneg %p269
        %p495 = pneg %p266
        %p496 = pneg %p290
        %p497 = pneg %p287
        %p498 = pneg %p311
        %p499 = pneg %p308
        %p500 = pneg %p332
        %p501 = pneg %p329
        %p502 = pneg %p358
        %p503 = pneg %p355
        %s504 = sand.u32 %s345, 1
        %s505 = scalar_lea.sflag [#allocation6], %s504
        %s506 = sand.u32 %s345, 1
        %s507 = smul.addr %s506, 16
        %s508 = scalar_lea.vmem [#allocation5], %s507
        %p509 = scmp.lt.s32.totalorder %s29, 3
        %s510 = scalar_select %p509, %s29, 3
        %s511 = smul.addr %s510, 4
        %s512 = smul.addr %s511, 8
        %s513 = scalar_lea.vmem %s2, %s512
        %p514 = scmp.lt.s32.totalorder %s29, 3
        %s515 = scalar_select %p514, %s29, 3
        %s516 = smul.addr %s515, 4
        %s517 = smul.addr %s516, 8
        %s518 = scalar_lea.vmem %s3, %s517
        %p519 = scmp.lt.s32.totalorder %s29, 3
        %s520 = scalar_select %p519, %s29, 3
        %s521 = smul.addr %s520, 4
        %s522 = smul.addr %s521, 8
        %s523 = scalar_lea.vmem %s4, %s522
        %p524 = scmp.lt.s32.totalorder %s29, 3
        %s525 = scalar_select %p524, %s29, 3
        %s526 = scalar_lea.vmem %s5, %s525
        %p527 = scmp.lt.s32.totalorder %s29, 3
        %s528 = scalar_select %p527, %s29, 3
        %s529 = scalar_lea.vmem %s6, %s528
        %p530 = scmp.lt.s32.totalorder %s29, 3
        %s531 = scalar_select %p530, %s29, 3
        %s532 = scalar_lea.vmem %s7, %s531
        %p533 = scmp.lt.s32.totalorder %s29, 3
        %s534 = scalar_select %p533, %s29, 3
        %s535 = smul.addr %s534, 8
        %s536 = scalar_lea.vmem %s8, %s535
        %v537 = vld [vmem:[%s0] sm:$0xff]
        %v538 = vld [vmem:[%s0 + $0x8] sm:$0xff]
        %v539 = vld [vmem:[%s513] sm:$0xff]
        %v540 = vld [vmem:[%s513 + $0x8] sm:$0xff]
        %v541 = vld [vmem:[%s513 + $0x10] sm:$0xff]
        %v542 = vld [vmem:[%s513 + $0x18] sm:$0xff]
        %v543 = vld [vmem:[%s526] sm:$0x1]
        %v545 = vlaneseq
        %v546 = vshrl.u32 %v545, 7
        %v547 = vsub.s32 0, %v546
        %v548 = vrot.slane %v543, %v547
        %vm550 = vcmask 261120
        %v552 = vsel %vm550, %v537, 0
        %v555 = vsel %vm550, %v538, 0
        %557 = vmatprep.subr.mxu0 0.0
        %558 = vmatpush1.msra.mxu0 %v539
        %559 = vmatprep.subr.mxu0 0.0
        %560 = vmatpush1.msra.mxu0 %v540
        %561 = vmatprep.subr.mxu0 0.0
        %562 = vmatpush1.msra.mxu0 %v541
        %563 = vmatprep.subr.mxu0 0.0
        %564 = vmatpush1.msra.mxu0 %v542
        %565 = vmatprep.subr.mxu0 0.0
        %566 = vmatpush1.msra.mxu0 0.0
        %567 = vmatprep.subr.mxu0 0.0
        %568 = vmatpush1.msra.mxu0 0.0
        %569 = vmatprep.subr.mxu0 0.0
        %570 = vmatpush1.msra.mxu0 0.0
        %571 = vmatprep.subr.mxu0 0.0
        %572 = vmatpush1.msra.mxu0 0.0
        %573 = vmatprep.subr.mxu0 0.0
        %574 = vmatpush1.msra.mxu0 0.0
        %575 = vmatprep.subr.mxu0 0.0
        %576 = vmatpush1.msra.mxu0 0.0
        %577 = vmatprep.subr.mxu0 0.0
        %578 = vmatpush1.msra.mxu0 0.0
        %579 = vmatprep.subr.mxu0 0.0
        %580 = vmatpush1.msra.mxu0 0.0
        %581 = vmatprep.subr.mxu0 0.0
        %582 = vmatpush1.msra.mxu0 0.0
        %583 = vmatprep.subr.mxu0 0.0
        %584 = vmatpush1.msra.mxu0 0.0
        %585 = vmatprep.subr.mxu0 0.0
        %586 = vmatpush1.msra.mxu0 0.0
        %587 = vmatprep.subr.mxu0 0.0
        %588 = vmatpush1.msra.mxu0 0.0
        %589 = vmatprep.subr.mxu0 0.0
        %590 = vmatpush1.msra.mxu0 0.0
        %591 = vmatprep.subr.mxu0 0.0
        %592 = vmatpush1.msra.mxu0 0.0
        %593 = vmatprep.subr.mxu0 0.0
        %594 = vmatpush1.msra.mxu0 0.0
        %595 = vmatprep.subr.mxu0 0.0
        %596 = vmatpush1.msra.mxu0 0.0
        %597 = vmatprep.subr.mxu0 0.0
        %598 = vmatpush1.msra.mxu0 0.0
        %599 = vmatprep.subr.mxu0 0.0
        %600 = vmatpush1.msra.mxu0 0.0
        %601 = vmatprep.subr.mxu0 0.0
        %602 = vmatpush1.msra.mxu0 0.0
        %603 = vmatprep.subr.mxu0 0.0
        %604 = vmatpush1.msra.mxu0 0.0
        %605 = vmatprep.subr.mxu0 0.0
        %606 = vmatpush1.msra.mxu0 0.0
        %607 = vmatprep.subr.mxu0 0.0
        %608 = vmatpush1.msra.mxu0 0.0
        %609 = vmatprep.subr.mxu0 0.0
        %610 = vmatpush1.msra.mxu0 0.0
        %611 = vmatprep.subr.mxu0 0.0
        %612 = vmatpush1.msra.mxu0 0.0
        %613 = vmatprep.subr.mxu0 0.0
        %614 = vmatpush1.msra.mxu0 0.0
        %615 = vmatprep.subr.mxu0 0.0
        %616 = vmatpush1.msra.mxu0 0.0
        %617 = vmatprep.subr.mxu0 0.0
        %618 = vmatpush1.msra.mxu0 0.0
        %619 = vmatprep.subr.mxu0 0.0
        %620 = vmatpush1.msra.mxu0 0.0
        %621 = vmatprep.mubr.f32.mxu0 0.0
        %622 = vmatmul.mubr.f32.gmra.mrb[0].mxu0 %v552
        %v623 = vpop.f32.mrb[0].mxu0
        %v624 = vadd.f32 %v548, %v623
        %v625 = vpop.f32.mrb[0].mxu0
        %626 = vmatprep.mubr.f32.mxu0 0.0
        %627 = vmatmul.mubr.f32.gmra.mrb[0].mxu0 %v555
        %v628 = vpop.f32.mrb[0].mxu0
        %v629 = vadd.f32 %v548, %v628
        %v630 = vpop.f32.mrb[0].mxu0
        %631 = vdwg.mxu0
        %v632 = vld [vmem:[%s518] sm:$0xff]
        %v633 = vld [vmem:[%s518 + $0x8] sm:$0xff]
        %v634 = vld [vmem:[%s518 + $0x10] sm:$0xff]
        %v635 = vld [vmem:[%s518 + $0x18] sm:$0xff]
        %v636 = vld [vmem:[%s529] sm:$0x1]
        %v638 = vlaneseq
        %v639 = vshrl.u32 %v638, 7
        %v640 = vsub.s32 0, %v639
        %v641 = vrot.slane %v636, %v640
        %643 = vmatprep.subr.mxu0 0.0
        %644 = vmatpush1.msra.mxu0 %v632
        %645 = vmatprep.subr.mxu0 0.0
        %646 = vmatpush1.msra.mxu0 %v633
        %647 = vmatprep.subr.mxu0 0.0
        %648 = vmatpush1.msra.mxu0 %v634
        %649 = vmatprep.subr.mxu0 0.0
        %650 = vmatpush1.msra.mxu0 %v635
        %651 = vmatprep.subr.mxu0 0.0
        %652 = vmatpush1.msra.mxu0 0.0
        %653 = vmatprep.subr.mxu0 0.0
        %654 = vmatpush1.msra.mxu0 0.0
        %655 = vmatprep.subr.mxu0 0.0
        %656 = vmatpush1.msra.mxu0 0.0
        %657 = vmatprep.subr.mxu0 0.0
        %658 = vmatpush1.msra.mxu0 0.0
        %659 = vmatprep.subr.mxu0 0.0
        %660 = vmatpush1.msra.mxu0 0.0
        %661 = vmatprep.subr.mxu0 0.0
        %662 = vmatpush1.msra.mxu0 0.0
        %663 = vmatprep.subr.mxu0 0.0
        %664 = vmatpush1.msra.mxu0 0.0
        %665 = vmatprep.subr.mxu0 0.0
        %666 = vmatpush1.msra.mxu0 0.0
        %667 = vmatprep.subr.mxu0 0.0
        %668 = vmatpush1.msra.mxu0 0.0
        %669 = vmatprep.subr.mxu0 0.0
        %670 = vmatpush1.msra.mxu0 0.0
        %671 = vmatprep.subr.mxu0 0.0
        %672 = vmatpush1.msra.mxu0 0.0
        %673 = vmatprep.subr.mxu0 0.0
        %674 = vmatpush1.msra.mxu0 0.0
        %675 = vmatprep.subr.mxu0 0.0
        %676 = vmatpush1.msra.mxu0 0.0
        %677 = vmatprep.subr.mxu0 0.0
        %678 = vmatpush1.msra.mxu0 0.0
        %679 = vmatprep.subr.mxu0 0.0
        %680 = vmatpush1.msra.mxu0 0.0
        %681 = vmatprep.subr.mxu0 0.0
        %682 = vmatpush1.msra.mxu0 0.0
        %683 = vmatprep.subr.mxu0 0.0
        %684 = vmatpush1.msra.mxu0 0.0
        %685 = vmatprep.subr.mxu0 0.0
        %686 = vmatpush1.msra.mxu0 0.0
        %687 = vmatprep.subr.mxu0 0.0
        %688 = vmatpush1.msra.mxu0 0.0
        %689 = vmatprep.subr.mxu0 0.0
        %690 = vmatpush1.msra.mxu0 0.0
        %691 = vmatprep.subr.mxu0 0.0
        %692 = vmatpush1.msra.mxu0 0.0
        %693 = vmatprep.subr.mxu0 0.0
        %694 = vmatpush1.msra.mxu0 0.0
        %695 = vmatprep.subr.mxu0 0.0
        %696 = vmatpush1.msra.mxu0 0.0
        %697 = vmatprep.subr.mxu0 0.0
        %698 = vmatpush1.msra.mxu0 0.0
        %699 = vmatprep.subr.mxu0 0.0
        %700 = vmatpush1.msra.mxu0 0.0
        %701 = vmatprep.subr.mxu0 0.0
        %702 = vmatpush1.msra.mxu0 0.0
        %703 = vmatprep.subr.mxu0 0.0
        %704 = vmatpush1.msra.mxu0 0.0
        %705 = vmatprep.subr.mxu0 0.0
        %706 = vmatpush1.msra.mxu0 0.0
        %707 = vmatprep.mubr.f32.mxu0 0.0
        %708 = vmatmul.mubr.f32.gmra.mrb[0].mxu0 %v552
        %v709 = vpop.f32.mrb[0].mxu0
        %v710 = vadd.f32 %v641, %v709
        %v711 = vpop.f32.mrb[0].mxu0
        %712 = vmatprep.mubr.f32.mxu0 0.0
        %713 = vmatmul.mubr.f32.gmra.mrb[0].mxu0 %v555
        %v714 = vpop.f32.mrb[0].mxu0
        %v715 = vadd.f32 %v641, %v714
        %v716 = vpop.f32.mrb[0].mxu0
        %717 = vdwg.mxu0
        %v718 = vld [vmem:[%s523] sm:$0xff]
        %v719 = vld [vmem:[%s523 + $0x8] sm:$0xff]
        %v720 = vld [vmem:[%s523 + $0x10] sm:$0xff]
        %v721 = vld [vmem:[%s523 + $0x18] sm:$0xff]
        %v722 = vld [vmem:[%s532] sm:$0x1]
        %v724 = vlaneseq
        %v725 = vshrl.u32 %v724, 7
        %v726 = vsub.s32 0, %v725
        %v727 = vrot.slane %v722, %v726
        %729 = vmatprep.subr.mxu0 0.0
        %730 = vmatpush1.msra.mxu0 %v718
        %731 = vmatprep.subr.mxu0 0.0
        %732 = vmatpush1.msra.mxu0 %v719
        %733 = vmatprep.subr.mxu0 0.0
        %734 = vmatpush1.msra.mxu0 %v720
        %735 = vmatprep.subr.mxu0 0.0
        %736 = vmatpush1.msra.mxu0 %v721
        %737 = vmatprep.subr.mxu0 0.0
        %738 = vmatpush1.msra.mxu0 0.0
        %739 = vmatprep.subr.mxu0 0.0
        %740 = vmatpush1.msra.mxu0 0.0
        %741 = vmatprep.subr.mxu0 0.0
        %742 = vmatpush1.msra.mxu0 0.0
        %743 = vmatprep.subr.mxu0 0.0
        %744 = vmatpush1.msra.mxu0 0.0
        %745 = vmatprep.subr.mxu0 0.0
        %746 = vmatpush1.msra.mxu0 0.0
        %747 = vmatprep.subr.mxu0 0.0
        %748 = vmatpush1.msra.mxu0 0.0
        %749 = vmatprep.subr.mxu0 0.0
        %750 = vmatpush1.msra.mxu0 0.0
        %751 = vmatprep.subr.mxu0 0.0
        %752 = vmatpush1.msra.mxu0 0.0
        %753 = vmatprep.subr.mxu0 0.0
        %754 = vmatpush1.msra.mxu0 0.0
        %755 = vmatprep.subr.mxu0 0.0
        %756 = vmatpush1.msra.mxu0 0.0
        %757 = vmatprep.subr.mxu0 0.0
        %758 = vmatpush1.msra.mxu0 0.0
        %759 = vmatprep.subr.mxu0 0.0
        %760 = vmatpush1.msra.mxu0 0.0
        %761 = vmatprep.subr.mxu0 0.0
        %762 = vmatpush1.msra.mxu0 0.0
        %763 = vmatprep.subr.mxu0 0.0
        %764 = vmatpush1.msra.mxu0 0.0
        %765 = vmatprep.subr.mxu0 0.0
        %766 = vmatpush1.msra.mxu0 0.0
        %767 = vmatprep.subr.mxu0 0.0
        %768 = vmatpush1.msra.mxu0 0.0
        %769 = vmatprep.subr.mxu0 0.0
        %770 = vmatpush1.msra.mxu0 0.0
        %771 = vmatprep.subr.mxu0 0.0
        %772 = vmatpush1.msra.mxu0 0.0
        %773 = vmatprep.subr.mxu0 0.0
        %774 = vmatpush1.msra.mxu0 0.0
        %775 = vmatprep.subr.mxu0 0.0
        %776 = vmatpush1.msra.mxu0 0.0
        %777 = vmatprep.subr.mxu0 0.0
        %778 = vmatpush1.msra.mxu0 0.0
        %779 = vmatprep.subr.mxu0 0.0
        %780 = vmatpush1.msra.mxu0 0.0
        %781 = vmatprep.subr.mxu0 0.0
        %782 = vmatpush1.msra.mxu0 0.0
        %783 = vmatprep.subr.mxu0 0.0
        %784 = vmatpush1.msra.mxu0 0.0
        %785 = vmatprep.subr.mxu0 0.0
        %786 = vmatpush1.msra.mxu0 0.0
        %787 = vmatprep.subr.mxu0 0.0
        %788 = vmatpush1.msra.mxu0 0.0
        %789 = vmatprep.subr.mxu0 0.0
        %790 = vmatpush1.msra.mxu0 0.0
        %791 = vmatprep.subr.mxu0 0.0
        %792 = vmatpush1.msra.mxu0 0.0
        %793 = vmatprep.mubr.f32.mxu0 0.0
        %794 = vmatmul.mubr.f32.gmra.mrb[0].mxu0 %v552
        %v795 = vpop.f32.mrb[0].mxu0
        %v796 = vadd.f32 %v727, %v795
        %v797 = vpop.f32.mrb[0].mxu0
        %798 = vmatprep.mubr.f32.mxu0 0.0
        %799 = vmatmul.mubr.f32.gmra.mrb[0].mxu0 %v555
        %v800 = vpop.f32.mrb[0].mxu0
        %v801 = vadd.f32 %v727, %v800
        %v802 = vpop.f32.mrb[0].mxu0
        %803 = vdwg.mxu0
        %v806 = vcombine.high %v624, %v624
        %v808 = vunpack.c.l.s4 1966171168
        %v809 = vunpack.c.0.s8 %v808
        %v810 = vlaneseq
        %v811 = vshrl.u32 %v810, 7
        %v812 = vsub.s32 %v809, %v811
        %v813 = vrot.slane %v624, %v812
        %v815 = vunpack.c.l.s4 1966171168
        %v816 = vunpack.c.0.s8 %v815
        %v817 = vlaneseq
        %v818 = vshrl.u32 %v817, 7
        %v819 = vsub.s32 %v816, %v818
        %v820 = vrot.slane %v806, %v819
        %v821 = vcombine.high %v813, %v813
        %v822 = vcombine.high %v820, %v820
        %v824 = vunpack.c.l.s4 1966171168
        %v825 = vunpack.c.0.s8 %v824
        %v826 = vlaneseq
        %v827 = vshrl.u32 %v826, 7
        %v828 = vsub.s32 %v825, %v827
        %v829 = vrot.slane %v813, %v828
        %v831 = vunpack.c.l.s4 1966171168
        %v832 = vunpack.c.0.s8 %v831
        %v833 = vlaneseq
        %v834 = vshrl.u32 %v833, 7
        %v835 = vsub.s32 %v832, %v834
        %v836 = vrot.slane %v820, %v835
        %v838 = vunpack.c.l.s4 1966171168
        %v839 = vunpack.c.0.s8 %v838
        %v840 = vlaneseq
        %v841 = vshrl.u32 %v840, 7
        %v842 = vsub.s32 %v839, %v841
        %v843 = vrot.slane %v821, %v842
        %v845 = vunpack.c.l.s4 1966171168
        %v846 = vunpack.c.0.s8 %v845
        %v847 = vlaneseq
        %v848 = vshrl.u32 %v847, 7
        %v849 = vsub.s32 %v846, %v848
        %v850 = vrot.slane %v822, %v849
        %v851 = vcombine.high %v829, %v829
        %v852 = vcombine.high %v836, %v836
        %v853 = vcombine.high %v843, %v843
        %v854 = vcombine.high %v850, %v850
        %v855 = vcombine.high %v629, %v629
        %v857 = vunpack.c.l.s4 1966171168
        %v858 = vunpack.c.0.s8 %v857
        %v859 = vlaneseq
        %v860 = vshrl.u32 %v859, 7
        %v861 = vsub.s32 %v858, %v860
        %v862 = vrot.slane %v629, %v861
        %v864 = vunpack.c.l.s4 1966171168
        %v865 = vunpack.c.0.s8 %v864
        %v866 = vlaneseq
        %v867 = vshrl.u32 %v866, 7
        %v868 = vsub.s32 %v865, %v867
        %v869 = vrot.slane %v855, %v868
        %v870 = vcombine.high %v862, %v862
        %v871 = vcombine.high %v869, %v869
        %v873 = vunpack.c.l.s4 1966171168
        %v874 = vunpack.c.0.s8 %v873
        %v875 = vlaneseq
        %v876 = vshrl.u32 %v875, 7
        %v877 = vsub.s32 %v874, %v876
        %v878 = vrot.slane %v862, %v877
        %v880 = vunpack.c.l.s4 1966171168
        %v881 = vunpack.c.0.s8 %v880
        %v882 = vlaneseq
        %v883 = vshrl.u32 %v882, 7
        %v884 = vsub.s32 %v881, %v883
        %v885 = vrot.slane %v869, %v884
        %v887 = vunpack.c.l.s4 1966171168
        %v888 = vunpack.c.0.s8 %v887
        %v889 = vlaneseq
        %v890 = vshrl.u32 %v889, 7
        %v891 = vsub.s32 %v888, %v890
        %v892 = vrot.slane %v870, %v891
        %v894 = vunpack.c.l.s4 1966171168
        %v895 = vunpack.c.0.s8 %v894
        %v896 = vlaneseq
        %v897 = vshrl.u32 %v896, 7
        %v898 = vsub.s32 %v895, %v897
        %v899 = vrot.slane %v871, %v898
        %v900 = vcombine.high %v878, %v878
        %v901 = vcombine.high %v885, %v885
        %v902 = vcombine.high %v892, %v892
        %v903 = vcombine.high %v899, %v899
        %v904 = vlaneseq
        %v905 = vshrl.u32 %v904, 7
        %v906 = vsub.s32 0, %v905
        %v907 = vrot.slane %v829, %v906
        %v908 = vlaneseq
        %v909 = vshrl.u32 %v908, 7
        %v910 = vsub.s32 0, %v909
        %v911 = vrot.slane %v843, %v910
        %v912 = vlaneseq
        %v913 = vshrl.u32 %v912, 7
        %v914 = vsub.s32 0, %v913
        %v915 = vrot.slane %v851, %v914
        %v916 = vlaneseq
        %v917 = vshrl.u32 %v916, 7
        %v918 = vsub.s32 0, %v917
        %v919 = vrot.slane %v853, %v918
        %v920 = vlaneseq
        %v921 = vshrl.u32 %v920, 7
        %v922 = vsub.s32 0, %v921
        %v923 = vrot.slane %v836, %v922
        %v924 = vlaneseq
        %v925 = vshrl.u32 %v924, 7
        %v926 = vsub.s32 0, %v925
        %v927 = vrot.slane %v850, %v926
        %v928 = vlaneseq
        %v929 = vshrl.u32 %v928, 7
        %v930 = vsub.s32 0, %v929
        %v931 = vrot.slane %v852, %v930
        %v932 = vlaneseq
        %v933 = vshrl.u32 %v932, 7
        %v934 = vsub.s32 0, %v933
        %v935 = vrot.slane %v854, %v934
        %v936 = vlaneseq
        %v937 = vshrl.u32 %v936, 7
        %v938 = vsub.s32 0, %v937
        %v939 = vrot.slane %v878, %v938
        %v940 = vlaneseq
        %v941 = vshrl.u32 %v940, 7
        %v942 = vsub.s32 0, %v941
        %v943 = vrot.slane %v892, %v942
        %v944 = vlaneseq
        %v945 = vshrl.u32 %v944, 7
        %v946 = vsub.s32 0, %v945
        %v947 = vrot.slane %v900, %v946
        %v948 = vlaneseq
        %v949 = vshrl.u32 %v948, 7
        %v950 = vsub.s32 0, %v949
        %v951 = vrot.slane %v902, %v950
        %v952 = vlaneseq
        %v953 = vshrl.u32 %v952, 7
        %v954 = vsub.s32 0, %v953
        %v955 = vrot.slane %v885, %v954
        %v956 = vlaneseq
        %v957 = vshrl.u32 %v956, 7
        %v958 = vsub.s32 0, %v957
        %v959 = vrot.slane %v899, %v958
        %v960 = vlaneseq
        %v961 = vshrl.u32 %v960, 7
        %v962 = vsub.s32 0, %v961
        %v963 = vrot.slane %v901, %v962
        %v964 = vlaneseq
        %v965 = vshrl.u32 %v964, 7
        %v966 = vsub.s32 0, %v965
        %v967 = vrot.slane %v903, %v966
        %v984 = vmul.f32 %v907, %v710
        %v985 = vmul.f32 %v911, %v710
        %v986 = vmul.f32 %v915, %v710
        %v987 = vmul.f32 %v919, %v710
        %v988 = vmul.f32 %v923, %v710
        %v989 = vmul.f32 %v927, %v710
        %v990 = vmul.f32 %v931, %v710
        %v991 = vmul.f32 %v935, %v710
        %v992 = vmul.f32 %v939, %v715
        %v993 = vmul.f32 %v943, %v715
        %v994 = vmul.f32 %v947, %v715
        %v995 = vmul.f32 %v951, %v715
        %v996 = vmul.f32 %v955, %v715
        %v997 = vmul.f32 %v959, %v715
        %v998 = vmul.f32 %v963, %v715
        %v999 = vmul.f32 %v967, %v715
        %vm1000 = vcmask 64512
        %v1001 = vsel %vm1000, %v984, 0.0
        %1002 = vadd.xlane.f32.xlu0 %v1001
        %v1003 = vpop.xlane.xlu0 %1002
        %v1004 = vsel %vm1000, %v985, 0.0
        %1005 = vadd.xlane.f32.xlu0 %v1004
        %v1006 = vpop.xlane.xlu0 %1005
        %v1007 = vsel %vm1000, %v986, 0.0
        %1008 = vadd.xlane.f32.xlu0 %v1007
        %v1009 = vpop.xlane.xlu0 %1008
        %v1010 = vsel %vm1000, %v987, 0.0
        %1011 = vadd.xlane.f32.xlu0 %v1010
        %v1012 = vpop.xlane.xlu0 %1011
        %v1013 = vsel %vm1000, %v988, 0.0
        %1014 = vadd.xlane.f32.xlu0 %v1013
        %v1015 = vpop.xlane.xlu0 %1014
        %v1016 = vsel %vm1000, %v989, 0.0
        %1017 = vadd.xlane.f32.xlu0 %v1016
        %v1018 = vpop.xlane.xlu0 %1017
        %v1019 = vsel %vm1000, %v990, 0.0
        %1020 = vadd.xlane.f32.xlu0 %v1019
        %v1021 = vpop.xlane.xlu0 %1020
        %v1022 = vsel %vm1000, %v991, 0.0
        %1023 = vadd.xlane.f32.xlu0 %v1022
        %v1024 = vpop.xlane.xlu0 %1023
        %v1025 = vsel %vm1000, %v992, 0.0
        %1026 = vadd.xlane.f32.xlu0 %v1025
        %v1027 = vpop.xlane.xlu0 %1026
        %v1028 = vsel %vm1000, %v993, 0.0
        %1029 = vadd.xlane.f32.xlu0 %v1028
        %v1030 = vpop.xlane.xlu0 %1029
        %v1031 = vsel %vm1000, %v994, 0.0
        %1032 = vadd.xlane.f32.xlu0 %v1031
        %v1033 = vpop.xlane.xlu0 %1032
        %v1034 = vsel %vm1000, %v995, 0.0
        %1035 = vadd.xlane.f32.xlu0 %v1034
        %v1036 = vpop.xlane.xlu0 %1035
        %v1037 = vsel %vm1000, %v996, 0.0
        %1038 = vadd.xlane.f32.xlu0 %v1037
        %v1039 = vpop.xlane.xlu0 %1038
        %v1040 = vsel %vm1000, %v997, 0.0
        %1041 = vadd.xlane.f32.xlu0 %v1040
        %v1042 = vpop.xlane.xlu0 %1041
        %v1043 = vsel %vm1000, %v998, 0.0
        %1044 = vadd.xlane.f32.xlu0 %v1043
        %v1045 = vpop.xlane.xlu0 %1044
        %v1046 = vsel %vm1000, %v999, 0.0
        %1047 = vadd.xlane.f32.xlu0 %v1046
        %v1048 = vpop.xlane.xlu0 %1047
        %v1049 = vld [vmem:[%s1] sm:$0x1]
        %v1050 = vld [vmem:[%s1 + $0x1] sm:$0x1]
        %v1053 = vlaneseq
        %v1054 = vshrl.u32 %v1053, 7
        %v1055 = vsub.s32 0, %v1054
        %v1056 = vrot.slane %v1049, %v1055
        %v1057 = vlaneseq
        %v1058 = vshrl.u32 %v1057, 7
        %v1059 = vsub.s32 0, %v1058
        %v1060 = vrot.slane %v1050, %v1059
        %1062 = vbcast.lane.b32.xlu0 %v1056, 256
        %v1063 = vpop.permute.xlu0 %1062
        %1065 = vbcast.lane.b32.xlu0 %v1060, 256
        %v1066 = vpop.permute.xlu0 %1065
        %v1069 = vadd.f32 %v1003, %v1063
        %v1070 = vadd.f32 %v1006, %v1063
        %v1071 = vadd.f32 %v1009, %v1063
        %v1072 = vadd.f32 %v1012, %v1063
        %v1073 = vadd.f32 %v1015, %v1063
        %v1074 = vadd.f32 %v1018, %v1063
        %v1075 = vadd.f32 %v1021, %v1063
        %v1076 = vadd.f32 %v1024, %v1063
        %v1077 = vadd.f32 %v1027, %v1066
        %v1078 = vadd.f32 %v1030, %v1066
        %v1079 = vadd.f32 %v1033, %v1066
        %v1080 = vadd.f32 %v1036, %v1066
        %v1081 = vadd.f32 %v1039, %v1066
        %v1082 = vadd.f32 %v1042, %v1066
        %v1083 = vadd.f32 %v1045, %v1066
        %v1084 = vadd.f32 %v1048, %v1066
        %1101 = vset.pattern.permute.xlu0 0
        %1102 = vperm.xlu0 %1101, %v1069
        %v1103 = vpop.permute.xlu0 %1102
        %1104 = vset.pattern.permute.xlu0 0
        %1105 = vperm.xlu0 %1104, %v1070
        %v1106 = vpop.permute.xlu0 %1105
        %1107 = vset.pattern.permute.xlu0 0
        %1108 = vperm.xlu0 %1107, %v1071
        %v1109 = vpop.permute.xlu0 %1108
        %1110 = vset.pattern.permute.xlu0 0
        %1111 = vperm.xlu0 %1110, %v1072
        %v1112 = vpop.permute.xlu0 %1111
        %1113 = vset.pattern.permute.xlu0 0
        %1114 = vperm.xlu0 %1113, %v1073
        %v1115 = vpop.permute.xlu0 %1114
        %1116 = vset.pattern.permute.xlu0 0
        %1117 = vperm.xlu0 %1116, %v1074
        %v1118 = vpop.permute.xlu0 %1117
        %1119 = vset.pattern.permute.xlu0 0
        %1120 = vperm.xlu0 %1119, %v1075
        %v1121 = vpop.permute.xlu0 %1120
        %1122 = vset.pattern.permute.xlu0 0
        %1123 = vperm.xlu0 %1122, %v1076
        %v1124 = vpop.permute.xlu0 %1123
        %1125 = vset.pattern.permute.xlu0 0
        %1126 = vperm.xlu0 %1125, %v1077
        %v1127 = vpop.permute.xlu0 %1126
        %1128 = vset.pattern.permute.xlu0 0
        %1129 = vperm.xlu0 %1128, %v1078
        %v1130 = vpop.permute.xlu0 %1129
        %1131 = vset.pattern.permute.xlu0 0
        %1132 = vperm.xlu0 %1131, %v1079
        %v1133 = vpop.permute.xlu0 %1132
        %1134 = vset.pattern.permute.xlu0 0
        %1135 = vperm.xlu0 %1134, %v1080
        %v1136 = vpop.permute.xlu0 %1135
        %1137 = vset.pattern.permute.xlu0 0
        %1138 = vperm.xlu0 %1137, %v1081
        %v1139 = vpop.permute.xlu0 %1138
        %1140 = vset.pattern.permute.xlu0 0
        %1141 = vperm.xlu0 %1140, %v1082
        %v1142 = vpop.permute.xlu0 %1141
        %1143 = vset.pattern.permute.xlu0 0
        %1144 = vperm.xlu0 %1143, %v1083
        %v1145 = vpop.permute.xlu0 %1144
        %1146 = vset.pattern.permute.xlu0 0
        %1147 = vperm.xlu0 %1146, %v1084
        %v1148 = vpop.permute.xlu0 %1147
        %v1149 = vlaneseq
        %v1150 = vand.u32 %v1149, 127
        %v1151 = vlaneseq
        %v1152 = vshrl.u32 %v1151, 7
        %v1153 = vsub.s32 %v1150, %v1152
        %v1154 = vrot.slane %v1103, %v1153
        %v1155 = vlaneseq
        %v1156 = vshrl.u32 %v1155, 7
        %v1157 = vsub.s32 %v1150, %v1156
        %v1158 = vrot.slane %v1106, %v1157
        %v1159 = vlaneseq
        %v1160 = vshrl.u32 %v1159, 7
        %v1161 = vsub.s32 %v1150, %v1160
        %v1162 = vrot.slane %v1109, %v1161
        %v1163 = vlaneseq
        %v1164 = vshrl.u32 %v1163, 7
        %v1165 = vsub.s32 %v1150, %v1164
        %v1166 = vrot.slane %v1112, %v1165
        %v1167 = vlaneseq
        %v1168 = vshrl.u32 %v1167, 7
        %v1169 = vsub.s32 %v1150, %v1168
        %v1170 = vrot.slane %v1115, %v1169
        %v1171 = vlaneseq
        %v1172 = vshrl.u32 %v1171, 7
        %v1173 = vsub.s32 %v1150, %v1172
        %v1174 = vrot.slane %v1118, %v1173
        %v1175 = vlaneseq
        %v1176 = vshrl.u32 %v1175, 7
        %v1177 = vsub.s32 %v1150, %v1176
        %v1178 = vrot.slane %v1121, %v1177
        %v1179 = vlaneseq
        %v1180 = vshrl.u32 %v1179, 7
        %v1181 = vsub.s32 %v1150, %v1180
        %v1182 = vrot.slane %v1124, %v1181
        %v1183 = vlaneseq
        %v1184 = vshrl.u32 %v1183, 7
        %v1185 = vsub.s32 %v1150, %v1184
        %v1186 = vrot.slane %v1127, %v1185
        %v1187 = vlaneseq
        %v1188 = vshrl.u32 %v1187, 7
        %v1189 = vsub.s32 %v1150, %v1188
        %v1190 = vrot.slane %v1130, %v1189
        %v1191 = vlaneseq
        %v1192 = vshrl.u32 %v1191, 7
        %v1193 = vsub.s32 %v1150, %v1192
        %v1194 = vrot.slane %v1133, %v1193
        %v1195 = vlaneseq
        %v1196 = vshrl.u32 %v1195, 7
        %v1197 = vsub.s32 %v1150, %v1196
        %v1198 = vrot.slane %v1136, %v1197
        %v1199 = vlaneseq
        %v1200 = vshrl.u32 %v1199, 7
        %v1201 = vsub.s32 %v1150, %v1200
        %v1202 = vrot.slane %v1139, %v1201
        %v1203 = vlaneseq
        %v1204 = vshrl.u32 %v1203, 7
        %v1205 = vsub.s32 %v1150, %v1204
        %v1206 = vrot.slane %v1142, %v1205
        %v1207 = vlaneseq
        %v1208 = vshrl.u32 %v1207, 7
        %v1209 = vsub.s32 %v1150, %v1208
        %v1210 = vrot.slane %v1145, %v1209
        %v1211 = vlaneseq
        %v1212 = vshrl.u32 %v1211, 7
        %v1213 = vsub.s32 %v1150, %v1212
        %v1214 = vrot.slane %v1148, %v1213
        %vm1215 = vcmask 1041409
        %v1216 = vsel %vm1215, %v1158, %v1154
        %vm1217 = vcmask 1042434
        %v1218 = vsel %vm1217, %v1162, %v1216
        %vm1219 = vcmask 1043459
        %v1220 = vsel %vm1219, %v1166, %v1218
        %vm1221 = vcmask 1044484
        %v1222 = vsel %vm1221, %v1170, %v1220
        %vm1223 = vcmask 1045509
        %v1224 = vsel %vm1223, %v1174, %v1222
        %vm1225 = vcmask 1046534
        %v1226 = vsel %vm1225, %v1178, %v1224
        %vm1227 = vcmask 1047559
        %v1228 = vsel %vm1227, %v1182, %v1226
        %v1229 = vsel %vm1215, %v1190, %v1186
        %v1230 = vsel %vm1217, %v1194, %v1229
        %v1231 = vsel %vm1219, %v1198, %v1230
        %v1232 = vsel %vm1221, %v1202, %v1231
        %v1233 = vsel %vm1223, %v1206, %v1232
        %v1234 = vsel %vm1225, %v1210, %v1233
        %v1235 = vsel %vm1227, %v1214, %v1234
        %v1238 = vsel %vm1000, %v1228, -inf
        %1239 = vmax.xlane.f32.xlu0 %v1238
        %v1240 = vpop.xlane.xlu0 %1239
        %v1241 = vsel %vm1000, %v1235, -inf
        %1242 = vmax.xlane.f32.xlu0 %v1241
        %v1243 = vpop.xlane.xlu0 %1242
        %v1246 = vlaneseq
        %v1247 = vshrl.u32 %v1246, 7
        %v1248 = vsub.s32 0, %v1247
        %v1249 = vrot.slane %v1240, %v1248
        %v1250 = vlaneseq
        %v1251 = vshrl.u32 %v1250, 7
        %v1252 = vsub.s32 1, %v1251
        %v1253 = vrot.slane %v1240, %v1252
        %v1254 = vlaneseq
        %v1255 = vshrl.u32 %v1254, 7
        %v1256 = vsub.s32 2, %v1255
        %v1257 = vrot.slane %v1240, %v1256
        %v1258 = vlaneseq
        %v1259 = vshrl.u32 %v1258, 7
        %v1260 = vsub.s32 3, %v1259
        %v1261 = vrot.slane %v1240, %v1260
        %v1262 = vlaneseq
        %v1263 = vshrl.u32 %v1262, 7
        %v1264 = vsub.s32 4, %v1263
        %v1265 = vrot.slane %v1240, %v1264
        %v1266 = vlaneseq
        %v1267 = vshrl.u32 %v1266, 7
        %v1268 = vsub.s32 5, %v1267
        %v1269 = vrot.slane %v1240, %v1268
        %v1270 = vlaneseq
        %v1271 = vshrl.u32 %v1270, 7
        %v1272 = vsub.s32 6, %v1271
        %v1273 = vrot.slane %v1240, %v1272
        %v1274 = vlaneseq
        %v1275 = vshrl.u32 %v1274, 7
        %v1276 = vsub.s32 7, %v1275
        %v1277 = vrot.slane %v1240, %v1276
        %v1278 = vlaneseq
        %v1279 = vshrl.u32 %v1278, 7
        %v1280 = vsub.s32 0, %v1279
        %v1281 = vrot.slane %v1243, %v1280
        %v1282 = vlaneseq
        %v1283 = vshrl.u32 %v1282, 7
        %v1284 = vsub.s32 1, %v1283
        %v1285 = vrot.slane %v1243, %v1284
        %v1286 = vlaneseq
        %v1287 = vshrl.u32 %v1286, 7
        %v1288 = vsub.s32 2, %v1287
        %v1289 = vrot.slane %v1243, %v1288
        %v1290 = vlaneseq
        %v1291 = vshrl.u32 %v1290, 7
        %v1292 = vsub.s32 3, %v1291
        %v1293 = vrot.slane %v1243, %v1292
        %v1294 = vlaneseq
        %v1295 = vshrl.u32 %v1294, 7
        %v1296 = vsub.s32 4, %v1295
        %v1297 = vrot.slane %v1243, %v1296
        %v1298 = vlaneseq
        %v1299 = vshrl.u32 %v1298, 7
        %v1300 = vsub.s32 5, %v1299
        %v1301 = vrot.slane %v1243, %v1300
        %v1302 = vlaneseq
        %v1303 = vshrl.u32 %v1302, 7
        %v1304 = vsub.s32 6, %v1303
        %v1305 = vrot.slane %v1243, %v1304
        %v1306 = vlaneseq
        %v1307 = vshrl.u32 %v1306, 7
        %v1308 = vsub.s32 7, %v1307
        %v1309 = vrot.slane %v1243, %v1308
        %v1326 = vsub.f32 %v1069, %v1249
        %v1327 = vsub.f32 %v1070, %v1253
        %v1328 = vsub.f32 %v1071, %v1257
        %v1329 = vsub.f32 %v1072, %v1261
        %v1330 = vsub.f32 %v1073, %v1265
        %v1331 = vsub.f32 %v1074, %v1269
        %v1332 = vsub.f32 %v1075, %v1273
        %v1333 = vsub.f32 %v1076, %v1277
        %v1334 = vsub.f32 %v1077, %v1281
        %v1335 = vsub.f32 %v1078, %v1285
        %v1336 = vsub.f32 %v1079, %v1289
        %v1337 = vsub.f32 %v1080, %v1293
        %v1338 = vsub.f32 %v1081, %v1297
        %v1339 = vsub.f32 %v1082, %v1301
        %v1340 = vsub.f32 %v1083, %v1305
        %v1341 = vsub.f32 %v1084, %v1309
        %v1342 = vmul.f32 %v1326, 1.442695
        %v1343 = vpow.pop %v1342
        %v1344 = vmul.f32 %v1327, 1.442695
        %v1345 = vpow.pop %v1344
        %v1346 = vmul.f32 %v1328, 1.442695
        %v1347 = vpow.pop %v1346
        %v1348 = vmul.f32 %v1329, 1.442695
        %v1349 = vpow.pop %v1348
        %v1350 = vmul.f32 %v1330, 1.442695
        %v1351 = vpow.pop %v1350
        %v1352 = vmul.f32 %v1331, 1.442695
        %v1353 = vpow.pop %v1352
        %v1354 = vmul.f32 %v1332, 1.442695
        %v1355 = vpow.pop %v1354
        %v1356 = vmul.f32 %v1333, 1.442695
        %v1357 = vpow.pop %v1356
        %v1358 = vmul.f32 %v1334, 1.442695
        %v1359 = vpow.pop %v1358
        %v1360 = vmul.f32 %v1335, 1.442695
        %v1361 = vpow.pop %v1360
        %v1362 = vmul.f32 %v1336, 1.442695
        %v1363 = vpow.pop %v1362
        %v1364 = vmul.f32 %v1337, 1.442695
        %v1365 = vpow.pop %v1364
        %v1366 = vmul.f32 %v1338, 1.442695
        %v1367 = vpow.pop %v1366
        %v1368 = vmul.f32 %v1339, 1.442695
        %v1369 = vpow.pop %v1368
        %v1370 = vmul.f32 %v1340, 1.442695
        %v1371 = vpow.pop %v1370
        %v1372 = vmul.f32 %v1341, 1.442695
        %v1373 = vpow.pop %v1372
        %1390 = vset.pattern.permute.xlu0 0
        %1391 = vperm.xlu0 %1390, %v1343
        %v1392 = vpop.permute.xlu0 %1391
        %1393 = vset.pattern.permute.xlu0 0
        %1394 = vperm.xlu0 %1393, %v1345
        %v1395 = vpop.permute.xlu0 %1394
        %1396 = vset.pattern.permute.xlu0 0
        %1397 = vperm.xlu0 %1396, %v1347
        %v1398 = vpop.permute.xlu0 %1397
        %1399 = vset.pattern.permute.xlu0 0
        %1400 = vperm.xlu0 %1399, %v1349
        %v1401 = vpop.permute.xlu0 %1400
        %1402 = vset.pattern.permute.xlu0 0
        %1403 = vperm.xlu0 %1402, %v1351
        %v1404 = vpop.permute.xlu0 %1403
        %1405 = vset.pattern.permute.xlu0 0
        %1406 = vperm.xlu0 %1405, %v1353
        %v1407 = vpop.permute.xlu0 %1406
        %1408 = vset.pattern.permute.xlu0 0
        %1409 = vperm.xlu0 %1408, %v1355
        %v1410 = vpop.permute.xlu0 %1409
        %1411 = vset.pattern.permute.xlu0 0
        %1412 = vperm.xlu0 %1411, %v1357
        %v1413 = vpop.permute.xlu0 %1412
        %1414 = vset.pattern.permute.xlu0 0
        %1415 = vperm.xlu0 %1414, %v1359
        %v1416 = vpop.permute.xlu0 %1415
        %1417 = vset.pattern.permute.xlu0 0
        %1418 = vperm.xlu0 %1417, %v1361
        %v1419 = vpop.permute.xlu0 %1418
        %1420 = vset.pattern.permute.xlu0 0
        %1421 = vperm.xlu0 %1420, %v1363
        %v1422 = vpop.permute.xlu0 %1421
        %1423 = vset.pattern.permute.xlu0 0
        %1424 = vperm.xlu0 %1423, %v1365
        %v1425 = vpop.permute.xlu0 %1424
        %1426 = vset.pattern.permute.xlu0 0
        %1427 = vperm.xlu0 %1426, %v1367
        %v1428 = vpop.permute.xlu0 %1427
        %1429 = vset.pattern.permute.xlu0 0
        %1430 = vperm.xlu0 %1429, %v1369
        %v1431 = vpop.permute.xlu0 %1430
        %1432 = vset.pattern.permute.xlu0 0
        %1433 = vperm.xlu0 %1432, %v1371
        %v1434 = vpop.permute.xlu0 %1433
        %1435 = vset.pattern.permute.xlu0 0
        %1436 = vperm.xlu0 %1435, %v1373
        %v1437 = vpop.permute.xlu0 %1436
        %v1438 = vlaneseq
        %v1439 = vshrl.u32 %v1438, 7
        %v1440 = vsub.s32 %v1150, %v1439
        %v1441 = vrot.slane %v1392, %v1440
        %v1442 = vlaneseq
        %v1443 = vshrl.u32 %v1442, 7
        %v1444 = vsub.s32 %v1150, %v1443
        %v1445 = vrot.slane %v1395, %v1444
        %v1446 = vlaneseq
        %v1447 = vshrl.u32 %v1446, 7
        %v1448 = vsub.s32 %v1150, %v1447
        %v1449 = vrot.slane %v1398, %v1448
        %v1450 = vlaneseq
        %v1451 = vshrl.u32 %v1450, 7
        %v1452 = vsub.s32 %v1150, %v1451
        %v1453 = vrot.slane %v1401, %v1452
        %v1454 = vlaneseq
        %v1455 = vshrl.u32 %v1454, 7
        %v1456 = vsub.s32 %v1150, %v1455
        %v1457 = vrot.slane %v1404, %v1456
        %v1458 = vlaneseq
        %v1459 = vshrl.u32 %v1458, 7
        %v1460 = vsub.s32 %v1150, %v1459
        %v1461 = vrot.slane %v1407, %v1460
        %v1462 = vlaneseq
        %v1463 = vshrl.u32 %v1462, 7
        %v1464 = vsub.s32 %v1150, %v1463
        %v1465 = vrot.slane %v1410, %v1464
        %v1466 = vlaneseq
        %v1467 = vshrl.u32 %v1466, 7
        %v1468 = vsub.s32 %v1150, %v1467
        %v1469 = vrot.slane %v1413, %v1468
        %v1470 = vlaneseq
        %v1471 = vshrl.u32 %v1470, 7
        %v1472 = vsub.s32 %v1150, %v1471
        %v1473 = vrot.slane %v1416, %v1472
        %v1474 = vlaneseq
        %v1475 = vshrl.u32 %v1474, 7
        %v1476 = vsub.s32 %v1150, %v1475
        %v1477 = vrot.slane %v1419, %v1476
        %v1478 = vlaneseq
        %v1479 = vshrl.u32 %v1478, 7
        %v1480 = vsub.s32 %v1150, %v1479
        %v1481 = vrot.slane %v1422, %v1480
        %v1482 = vlaneseq
        %v1483 = vshrl.u32 %v1482, 7
        %v1484 = vsub.s32 %v1150, %v1483
        %v1485 = vrot.slane %v1425, %v1484
        %v1486 = vlaneseq
        %v1487 = vshrl.u32 %v1486, 7
        %v1488 = vsub.s32 %v1150, %v1487
        %v1489 = vrot.slane %v1428, %v1488
        %v1490 = vlaneseq
        %v1491 = vshrl.u32 %v1490, 7
        %v1492 = vsub.s32 %v1150, %v1491
        %v1493 = vrot.slane %v1431, %v1492
        %v1494 = vlaneseq
        %v1495 = vshrl.u32 %v1494, 7
        %v1496 = vsub.s32 %v1150, %v1495
        %v1497 = vrot.slane %v1434, %v1496
        %v1498 = vlaneseq
        %v1499 = vshrl.u32 %v1498, 7
        %v1500 = vsub.s32 %v1150, %v1499
        %v1501 = vrot.slane %v1437, %v1500
        %v1502 = vsel %vm1215, %v1445, %v1441
        %v1503 = vsel %vm1217, %v1449, %v1502
        %v1504 = vsel %vm1219, %v1453, %v1503
        %v1505 = vsel %vm1221, %v1457, %v1504
        %v1506 = vsel %vm1223, %v1461, %v1505
        %v1507 = vsel %vm1225, %v1465, %v1506
        %v1508 = vsel %vm1227, %v1469, %v1507
        %v1509 = vsel %vm1215, %v1477, %v1473
        %v1510 = vsel %vm1217, %v1481, %v1509
        %v1511 = vsel %vm1219, %v1485, %v1510
        %v1512 = vsel %vm1221, %v1489, %v1511
        %v1513 = vsel %vm1223, %v1493, %v1512
        %v1514 = vsel %vm1225, %v1497, %v1513
        %v1515 = vsel %vm1227, %v1501, %v1514
        %v1518 = vsel %vm1000, %v1508, 0.0
        %1519 = vadd.xlane.f32.xlu0 %v1518
        %v1520 = vpop.xlane.xlu0 %1519
        %v1521 = vsel %vm1000, %v1515, 0.0
        %1522 = vadd.xlane.f32.xlu0 %v1521
        %v1523 = vpop.xlane.xlu0 %1522
        %v1524 = vrcp.pop %v1520
        %v1525 = vrcp.pop %v1523
        %v1526 = vmul.f32 %v1520, %v1524
        %v1527 = vmul.f32 %v1523, %v1525
        %v1528 = vsub.f32 2.0, %v1526
        %v1529 = vsub.f32 2.0, %v1527
        %v1530 = vmul.f32 %v1524, %v1528
        %v1531 = vmul.f32 %v1525, %v1529
        %v1534 = vlaneseq
        %v1535 = vshrl.u32 %v1534, 7
        %v1536 = vsub.s32 0, %v1535
        %v1537 = vrot.slane %v1530, %v1536
        %v1538 = vlaneseq
        %v1539 = vshrl.u32 %v1538, 7
        %v1540 = vsub.s32 1, %v1539
        %v1541 = vrot.slane %v1530, %v1540
        %v1542 = vlaneseq
        %v1543 = vshrl.u32 %v1542, 7
        %v1544 = vsub.s32 2, %v1543
        %v1545 = vrot.slane %v1530, %v1544
        %v1546 = vlaneseq
        %v1547 = vshrl.u32 %v1546, 7
        %v1548 = vsub.s32 3, %v1547
        %v1549 = vrot.slane %v1530, %v1548
        %v1550 = vlaneseq
        %v1551 = vshrl.u32 %v1550, 7
        %v1552 = vsub.s32 4, %v1551
        %v1553 = vrot.slane %v1530, %v1552
        %v1554 = vlaneseq
        %v1555 = vshrl.u32 %v1554, 7
        %v1556 = vsub.s32 5, %v1555
        %v1557 = vrot.slane %v1530, %v1556
        %v1558 = vlaneseq
        %v1559 = vshrl.u32 %v1558, 7
        %v1560 = vsub.s32 6, %v1559
        %v1561 = vrot.slane %v1530, %v1560
        %v1562 = vlaneseq
        %v1563 = vshrl.u32 %v1562, 7
        %v1564 = vsub.s32 7, %v1563
        %v1565 = vrot.slane %v1530, %v1564
        %v1566 = vlaneseq
        %v1567 = vshrl.u32 %v1566, 7
        %v1568 = vsub.s32 0, %v1567
        %v1569 = vrot.slane %v1531, %v1568
        %v1570 = vlaneseq
        %v1571 = vshrl.u32 %v1570, 7
        %v1572 = vsub.s32 1, %v1571
        %v1573 = vrot.slane %v1531, %v1572
        %v1574 = vlaneseq
        %v1575 = vshrl.u32 %v1574, 7
        %v1576 = vsub.s32 2, %v1575
        %v1577 = vrot.slane %v1531, %v1576
        %v1578 = vlaneseq
        %v1579 = vshrl.u32 %v1578, 7
        %v1580 = vsub.s32 3, %v1579
        %v1581 = vrot.slane %v1531, %v1580
        %v1582 = vlaneseq
        %v1583 = vshrl.u32 %v1582, 7
        %v1584 = vsub.s32 4, %v1583
        %v1585 = vrot.slane %v1531, %v1584
        %v1586 = vlaneseq
        %v1587 = vshrl.u32 %v1586, 7
        %v1588 = vsub.s32 5, %v1587
        %v1589 = vrot.slane %v1531, %v1588
        %v1590 = vlaneseq
        %v1591 = vshrl.u32 %v1590, 7
        %v1592 = vsub.s32 6, %v1591
        %v1593 = vrot.slane %v1531, %v1592
        %v1594 = vlaneseq
        %v1595 = vshrl.u32 %v1594, 7
        %v1596 = vsub.s32 7, %v1595
        %v1597 = vrot.slane %v1531, %v1596
        %v1614 = vmul.f32 %v1343, %v1537
        %v1615 = vmul.f32 %v1345, %v1541
        %v1616 = vmul.f32 %v1347, %v1545
        %v1617 = vmul.f32 %v1349, %v1549
        %v1618 = vmul.f32 %v1351, %v1553
        %v1619 = vmul.f32 %v1353, %v1557
        %v1620 = vmul.f32 %v1355, %v1561
        %v1621 = vmul.f32 %v1357, %v1565
        %v1622 = vmul.f32 %v1359, %v1569
        %v1623 = vmul.f32 %v1361, %v1573
        %v1624 = vmul.f32 %v1363, %v1577
        %v1625 = vmul.f32 %v1365, %v1581
        %v1626 = vmul.f32 %v1367, %v1585
        %v1627 = vmul.f32 %v1369, %v1589
        %v1628 = vmul.f32 %v1371, %v1593
        %v1629 = vmul.f32 %v1373, %v1597
        %1646 = vset.pattern.permute.xlu0 0
        %1647 = vperm.xlu0 %1646, %v1614
        %v1648 = vpop.permute.xlu0 %1647
        %1649 = vset.pattern.permute.xlu0 0
        %1650 = vperm.xlu0 %1649, %v1615
        %v1651 = vpop.permute.xlu0 %1650
        %1652 = vset.pattern.permute.xlu0 0
        %1653 = vperm.xlu0 %1652, %v1616
        %v1654 = vpop.permute.xlu0 %1653
        %1655 = vset.pattern.permute.xlu0 0
        %1656 = vperm.xlu0 %1655, %v1617
        %v1657 = vpop.permute.xlu0 %1656
        %1658 = vset.pattern.permute.xlu0 0
        %1659 = vperm.xlu0 %1658, %v1618
        %v1660 = vpop.permute.xlu0 %1659
        %1661 = vset.pattern.permute.xlu0 0
        %1662 = vperm.xlu0 %1661, %v1619
        %v1663 = vpop.permute.xlu0 %1662
        %1664 = vset.pattern.permute.xlu0 0
        %1665 = vperm.xlu0 %1664, %v1620
        %v1666 = vpop.permute.xlu0 %1665
        %1667 = vset.pattern.permute.xlu0 0
        %1668 = vperm.xlu0 %1667, %v1621
        %v1669 = vpop.permute.xlu0 %1668
        %1670 = vset.pattern.permute.xlu0 0
        %1671 = vperm.xlu0 %1670, %v1622
        %v1672 = vpop.permute.xlu0 %1671
        %1673 = vset.pattern.permute.xlu0 0
        %1674 = vperm.xlu0 %1673, %v1623
        %v1675 = vpop.permute.xlu0 %1674
        %1676 = vset.pattern.permute.xlu0 0
        %1677 = vperm.xlu0 %1676, %v1624
        %v1678 = vpop.permute.xlu0 %1677
        %1679 = vset.pattern.permute.xlu0 0
        %1680 = vperm.xlu0 %1679, %v1625
        %v1681 = vpop.permute.xlu0 %1680
        %1682 = vset.pattern.permute.xlu0 0
        %1683 = vperm.xlu0 %1682, %v1626
        %v1684 = vpop.permute.xlu0 %1683
        %1685 = vset.pattern.permute.xlu0 0
        %1686 = vperm.xlu0 %1685, %v1627
        %v1687 = vpop.permute.xlu0 %1686
        %1688 = vset.pattern.permute.xlu0 0
        %1689 = vperm.xlu0 %1688, %v1628
        %v1690 = vpop.permute.xlu0 %1689
        %1691 = vset.pattern.permute.xlu0 0
        %1692 = vperm.xlu0 %1691, %v1629
        %v1693 = vpop.permute.xlu0 %1692
        %v1694 = vlaneseq
        %v1695 = vshrl.u32 %v1694, 7
        %v1696 = vsub.s32 %v1150, %v1695
        %v1697 = vrot.slane %v1648, %v1696
        %v1698 = vlaneseq
        %v1699 = vshrl.u32 %v1698, 7
        %v1700 = vsub.s32 %v1150, %v1699
        %v1701 = vrot.slane %v1651, %v1700
        %v1702 = vlaneseq
        %v1703 = vshrl.u32 %v1702, 7
        %v1704 = vsub.s32 %v1150, %v1703
        %v1705 = vrot.slane %v1654, %v1704
        %v1706 = vlaneseq
        %v1707 = vshrl.u32 %v1706, 7
        %v1708 = vsub.s32 %v1150, %v1707
        %v1709 = vrot.slane %v1657, %v1708
        %v1710 = vlaneseq
        %v1711 = vshrl.u32 %v1710, 7
        %v1712 = vsub.s32 %v1150, %v1711
        %v1713 = vrot.slane %v1660, %v1712
        %v1714 = vlaneseq
        %v1715 = vshrl.u32 %v1714, 7
        %v1716 = vsub.s32 %v1150, %v1715
        %v1717 = vrot.slane %v1663, %v1716
        %v1718 = vlaneseq
        %v1719 = vshrl.u32 %v1718, 7
        %v1720 = vsub.s32 %v1150, %v1719
        %v1721 = vrot.slane %v1666, %v1720
        %v1722 = vlaneseq
        %v1723 = vshrl.u32 %v1722, 7
        %v1724 = vsub.s32 %v1150, %v1723
        %v1725 = vrot.slane %v1669, %v1724
        %v1726 = vlaneseq
        %v1727 = vshrl.u32 %v1726, 7
        %v1728 = vsub.s32 %v1150, %v1727
        %v1729 = vrot.slane %v1672, %v1728
        %v1730 = vlaneseq
        %v1731 = vshrl.u32 %v1730, 7
        %v1732 = vsub.s32 %v1150, %v1731
        %v1733 = vrot.slane %v1675, %v1732
        %v1734 = vlaneseq
        %v1735 = vshrl.u32 %v1734, 7
        %v1736 = vsub.s32 %v1150, %v1735
        %v1737 = vrot.slane %v1678, %v1736
        %v1738 = vlaneseq
        %v1739 = vshrl.u32 %v1738, 7
        %v1740 = vsub.s32 %v1150, %v1739
        %v1741 = vrot.slane %v1681, %v1740
        %v1742 = vlaneseq
        %v1743 = vshrl.u32 %v1742, 7
        %v1744 = vsub.s32 %v1150, %v1743
        %v1745 = vrot.slane %v1684, %v1744
        %v1746 = vlaneseq
        %v1747 = vshrl.u32 %v1746, 7
        %v1748 = vsub.s32 %v1150, %v1747
        %v1749 = vrot.slane %v1687, %v1748
        %v1750 = vlaneseq
        %v1751 = vshrl.u32 %v1750, 7
        %v1752 = vsub.s32 %v1150, %v1751
        %v1753 = vrot.slane %v1690, %v1752
        %v1754 = vlaneseq
        %v1755 = vshrl.u32 %v1754, 7
        %v1756 = vsub.s32 %v1150, %v1755
        %v1757 = vrot.slane %v1693, %v1756
        %v1758 = vsel %vm1215, %v1701, %v1697
        %v1759 = vsel %vm1217, %v1705, %v1758
        %v1760 = vsel %vm1219, %v1709, %v1759
        %v1761 = vsel %vm1221, %v1713, %v1760
        %v1762 = vsel %vm1223, %v1717, %v1761
        %v1763 = vsel %vm1225, %v1721, %v1762
        %v1764 = vsel %vm1227, %v1725, %v1763
        %v1765 = vsel %vm1215, %v1733, %v1729
        %v1766 = vsel %vm1217, %v1737, %v1765
        %v1767 = vsel %vm1219, %v1741, %v1766
        %v1768 = vsel %vm1221, %v1745, %v1767
        %v1769 = vsel %vm1223, %v1749, %v1768
        %v1770 = vsel %vm1225, %v1753, %v1769
        %v1771 = vsel %vm1227, %v1757, %v1770
        %1774 = vst.msk [vmem:[%s508] sm:$0xff] %vm1000, %v1764
        %1775 = vst.msk [vmem:[%s508 + $0x8] sm:$0xff] %vm1000, %v1771
        %v1792 = vmul.f32 %v1648, %v796
        %v1793 = vmul.f32 %v1651, %v796
        %v1794 = vmul.f32 %v1654, %v796
        %v1795 = vmul.f32 %v1657, %v796
        %v1796 = vmul.f32 %v1660, %v796
        %v1797 = vmul.f32 %v1663, %v796
        %v1798 = vmul.f32 %v1666, %v796
        %v1799 = vmul.f32 %v1669, %v796
        %v1800 = vmul.f32 %v1672, %v801
        %v1801 = vmul.f32 %v1675, %v801
        %v1802 = vmul.f32 %v1678, %v801
        %v1803 = vmul.f32 %v1681, %v801
        %v1804 = vmul.f32 %v1684, %v801
        %v1805 = vmul.f32 %v1687, %v801
        %v1806 = vmul.f32 %v1690, %v801
        %v1807 = vmul.f32 %v1693, %v801
        %v1808 = vsel %vm1000, %v1792, 0.0
        %v1809 = vrot.slane %v1808, 4
        %v1810 = vadd.f32 %v1808, %v1809
        %v1811 = vrot.slane %v1810, 2
        %v1812 = vadd.f32 %v1810, %v1811
        %v1813 = vrot.slane %v1812, 1
        %v1814 = vadd.f32 %v1812, %v1813
        %v1815 = vsel %vm1000, %v1793, 0.0
        %v1816 = vrot.slane %v1815, 4
        %v1817 = vadd.f32 %v1815, %v1816
        %v1818 = vrot.slane %v1817, 2
        %v1819 = vadd.f32 %v1817, %v1818
        %v1820 = vrot.slane %v1819, 1
        %v1821 = vadd.f32 %v1819, %v1820
        %v1822 = vsel %vm1000, %v1794, 0.0
        %v1823 = vrot.slane %v1822, 4
        %v1824 = vadd.f32 %v1822, %v1823
        %v1825 = vrot.slane %v1824, 2
        %v1826 = vadd.f32 %v1824, %v1825
        %v1827 = vrot.slane %v1826, 1
        %v1828 = vadd.f32 %v1826, %v1827
        %v1829 = vsel %vm1000, %v1795, 0.0
        %v1830 = vrot.slane %v1829, 4
        %v1831 = vadd.f32 %v1829, %v1830
        %v1832 = vrot.slane %v1831, 2
        %v1833 = vadd.f32 %v1831, %v1832
        %v1834 = vrot.slane %v1833, 1
        %v1835 = vadd.f32 %v1833, %v1834
        %v1836 = vsel %vm1000, %v1796, 0.0
        %v1837 = vrot.slane %v1836, 4
        %v1838 = vadd.f32 %v1836, %v1837
        %v1839 = vrot.slane %v1838, 2
        %v1840 = vadd.f32 %v1838, %v1839
        %v1841 = vrot.slane %v1840, 1
        %v1842 = vadd.f32 %v1840, %v1841
        %v1843 = vsel %vm1000, %v1797, 0.0
        %v1844 = vrot.slane %v1843, 4
        %v1845 = vadd.f32 %v1843, %v1844
        %v1846 = vrot.slane %v1845, 2
        %v1847 = vadd.f32 %v1845, %v1846
        %v1848 = vrot.slane %v1847, 1
        %v1849 = vadd.f32 %v1847, %v1848
        %v1850 = vsel %vm1000, %v1798, 0.0
        %v1851 = vrot.slane %v1850, 4
        %v1852 = vadd.f32 %v1850, %v1851
        %v1853 = vrot.slane %v1852, 2
        %v1854 = vadd.f32 %v1852, %v1853
        %v1855 = vrot.slane %v1854, 1
        %v1856 = vadd.f32 %v1854, %v1855
        %v1857 = vsel %vm1000, %v1799, 0.0
        %v1858 = vrot.slane %v1857, 4
        %v1859 = vadd.f32 %v1857, %v1858
        %v1860 = vrot.slane %v1859, 2
        %v1861 = vadd.f32 %v1859, %v1860
        %v1862 = vrot.slane %v1861, 1
        %v1863 = vadd.f32 %v1861, %v1862
        %v1864 = vsel %vm1000, %v1800, 0.0
        %v1865 = vrot.slane %v1864, 4
        %v1866 = vadd.f32 %v1864, %v1865
        %v1867 = vrot.slane %v1866, 2
        %v1868 = vadd.f32 %v1866, %v1867
        %v1869 = vrot.slane %v1868, 1
        %v1870 = vadd.f32 %v1868, %v1869
        %v1871 = vsel %vm1000, %v1801, 0.0
        %v1872 = vrot.slane %v1871, 4
        %v1873 = vadd.f32 %v1871, %v1872
        %v1874 = vrot.slane %v1873, 2
        %v1875 = vadd.f32 %v1873, %v1874
        %v1876 = vrot.slane %v1875, 1
        %v1877 = vadd.f32 %v1875, %v1876
        %v1878 = vsel %vm1000, %v1802, 0.0
        %v1879 = vrot.slane %v1878, 4
        %v1880 = vadd.f32 %v1878, %v1879
        %v1881 = vrot.slane %v1880, 2
        %v1882 = vadd.f32 %v1880, %v1881
        %v1883 = vrot.slane %v1882, 1
        %v1884 = vadd.f32 %v1882, %v1883
        %v1885 = vsel %vm1000, %v1803, 0.0
        %v1886 = vrot.slane %v1885, 4
        %v1887 = vadd.f32 %v1885, %v1886
        %v1888 = vrot.slane %v1887, 2
        %v1889 = vadd.f32 %v1887, %v1888
        %v1890 = vrot.slane %v1889, 1
        %v1891 = vadd.f32 %v1889, %v1890
        %v1892 = vsel %vm1000, %v1804, 0.0
        %v1893 = vrot.slane %v1892, 4
        %v1894 = vadd.f32 %v1892, %v1893
        %v1895 = vrot.slane %v1894, 2
        %v1896 = vadd.f32 %v1894, %v1895
        %v1897 = vrot.slane %v1896, 1
        %v1898 = vadd.f32 %v1896, %v1897
        %v1899 = vsel %vm1000, %v1805, 0.0
        %v1900 = vrot.slane %v1899, 4
        %v1901 = vadd.f32 %v1899, %v1900
        %v1902 = vrot.slane %v1901, 2
        %v1903 = vadd.f32 %v1901, %v1902
        %v1904 = vrot.slane %v1903, 1
        %v1905 = vadd.f32 %v1903, %v1904
        %v1906 = vsel %vm1000, %v1806, 0.0
        %v1907 = vrot.slane %v1906, 4
        %v1908 = vadd.f32 %v1906, %v1907
        %v1909 = vrot.slane %v1908, 2
        %v1910 = vadd.f32 %v1908, %v1909
        %v1911 = vrot.slane %v1910, 1
        %v1912 = vadd.f32 %v1910, %v1911
        %v1913 = vsel %vm1000, %v1807, 0.0
        %v1914 = vrot.slane %v1913, 4
        %v1915 = vadd.f32 %v1913, %v1914
        %v1916 = vrot.slane %v1915, 2
        %v1917 = vadd.f32 %v1915, %v1916
        %v1918 = vrot.slane %v1917, 1
        %v1919 = vadd.f32 %v1917, %v1918
        %v1920 = vld [vmem:[%s536] sm:$0xff]
        %v1937 = vsel %vm1215, %v1821, %v1814
        %v1938 = vsel %vm1217, %v1828, %v1937
        %v1939 = vsel %vm1219, %v1835, %v1938
        %v1940 = vsel %vm1221, %v1842, %v1939
        %v1941 = vsel %vm1223, %v1849, %v1940
        %v1942 = vsel %vm1225, %v1856, %v1941
        %v1943 = vsel %vm1227, %v1863, %v1942
        %v1944 = vsel %vm1215, %v1877, %v1870
        %v1945 = vsel %vm1217, %v1884, %v1944
        %v1946 = vsel %vm1219, %v1891, %v1945
        %v1947 = vsel %vm1221, %v1898, %v1946
        %v1948 = vsel %vm1223, %v1905, %v1947
        %v1949 = vsel %vm1225, %v1912, %v1948
        %v1950 = vsel %vm1227, %v1919, %v1949
        %v1951 = vsel %vm1000, %v1943, 0
        %v1953 = vsel %vm1000, %v1950, 0
        %1955 = vmatprep.subr.mxu0 0.0
        %1956 = vmatpush1.msra.mxu0 %v1920
        %1957 = vmatprep.subr.mxu0 0.0
        %1958 = vmatpush1.msra.mxu0 0.0
        %1959 = vmatprep.subr.mxu0 0.0
        %1960 = vmatpush1.msra.mxu0 0.0
        %1961 = vmatprep.subr.mxu0 0.0
        %1962 = vmatpush1.msra.mxu0 0.0
        %1963 = vmatprep.subr.mxu0 0.0
        %1964 = vmatpush1.msra.mxu0 0.0
        %1965 = vmatprep.subr.mxu0 0.0
        %1966 = vmatpush1.msra.mxu0 0.0
        %1967 = vmatprep.subr.mxu0 0.0
        %1968 = vmatpush1.msra.mxu0 0.0
        %1969 = vmatprep.subr.mxu0 0.0
        %1970 = vmatpush1.msra.mxu0 0.0
        %1971 = vmatprep.subr.mxu0 0.0
        %1972 = vmatpush1.msra.mxu0 0.0
        %1973 = vmatprep.subr.mxu0 0.0
        %1974 = vmatpush1.msra.mxu0 0.0
        %1975 = vmatprep.subr.mxu0 0.0
        %1976 = vmatpush1.msra.mxu0 0.0
        %1977 = vmatprep.subr.mxu0 0.0
        %1978 = vmatpush1.msra.mxu0 0.0
        %1979 = vmatprep.subr.mxu0 0.0
        %1980 = vmatpush1.msra.mxu0 0.0
        %1981 = vmatprep.subr.mxu0 0.0
        %1982 = vmatpush1.msra.mxu0 0.0
        %1983 = vmatprep.subr.mxu0 0.0
        %1984 = vmatpush1.msra.mxu0 0.0
        %1985 = vmatprep.subr.mxu0 0.0
        %1986 = vmatpush1.msra.mxu0 0.0
        %1987 = vmatprep.subr.mxu0 0.0
        %1988 = vmatpush1.msra.mxu0 0.0
        %1989 = vmatprep.subr.mxu0 0.0
        %1990 = vmatpush1.msra.mxu0 0.0
        %1991 = vmatprep.subr.mxu0 0.0
        %1992 = vmatpush1.msra.mxu0 0.0
        %1993 = vmatprep.subr.mxu0 0.0
        %1994 = vmatpush1.msra.mxu0 0.0
        %1995 = vmatprep.subr.mxu0 0.0
        %1996 = vmatpush1.msra.mxu0 0.0
        %1997 = vmatprep.subr.mxu0 0.0
        %1998 = vmatpush1.msra.mxu0 0.0
        %1999 = vmatprep.subr.mxu0 0.0
        %2000 = vmatpush1.msra.mxu0 0.0
        %2001 = vmatprep.subr.mxu0 0.0
        %2002 = vmatpush1.msra.mxu0 0.0
        %2003 = vmatprep.subr.mxu0 0.0
        %2004 = vmatpush1.msra.mxu0 0.0
        %2005 = vmatprep.subr.mxu0 0.0
        %2006 = vmatpush1.msra.mxu0 0.0
        %2007 = vmatprep.subr.mxu0 0.0
        %2008 = vmatpush1.msra.mxu0 0.0
        %2009 = vmatprep.subr.mxu0 0.0
        %2010 = vmatpush1.msra.mxu0 0.0
        %2011 = vmatprep.subr.mxu0 0.0
        %2012 = vmatpush1.msra.mxu0 0.0
        %2013 = vmatprep.subr.mxu0 0.0
        %2014 = vmatpush1.msra.mxu0 0.0
        %2015 = vmatprep.subr.mxu0 0.0
        %2016 = vmatpush1.msra.mxu0 0.0
        %2017 = vmatprep.subr.mxu0 0.0
        %2018 = vmatpush1.msra.mxu0 0.0
        %2019 = vmatprep.mubr.f32.mxu0 0.0
        %2020 = vmatmul.mubr.f32.gmra.mrb[0].mxu0 %v1951
        %v2021 = vpop.f32.mrb[0].mxu0
        %v2022 = vadd.f32 0.0, %v2021
        %v2023 = vpop.f32.mrb[0].mxu0
        %2024 = vmatprep.mubr.f32.mxu0 0.0
        %2025 = vmatmul.mubr.f32.gmra.mrb[0].mxu0 %v1953
        %v2026 = vpop.f32.mrb[0].mxu0
        %v2027 = vadd.f32 0.0, %v2026
        %v2028 = vpop.f32.mrb[0].mxu0
        %2029 = vdwg.mxu0
        %p2030 = scmp.eq.s32.totalorder %s29, 0
        // Predicated region
        $region69: #{tpu_custom_call.1} parent=67 // pred_check
          %p2031 = pneg %p2030
        $region70: #{tpu_custom_call.1} parent=67 // pred_check_branch
          %2033 = sbr.rel (%p2031) target = $region72
        $region71: #{tpu_custom_call.1} parent=67 // pred_region
          %v2034 = vld [vmem:[%s9] sm:$0x1]
          %v2036 = vlaneseq
          %v2037 = vshrl.u32 %v2036, 7
          %v2038 = vsub.s32 0, %v2037
          %v2039 = vrot.slane %v2034, %v2038
          %v2041 = vadd.f32 %v537, %v2039
          %v2042 = vadd.f32 %v538, %v2039
          %2043 = vst.msk [vmem:[#allocation2] sm:$0xff] %vm550, %v2041
          %2044 = vst.msk [vmem:[#allocation2 + $0x8] sm:$0xff] %vm550, %v2042
        $region72: #{tpu_custom_call.1} parent=67 // pred_fallthru
          _
        %v2045 = vld [vmem:[#allocation2] sm:$0xff]
        %v2046 = vld [vmem:[#allocation2 + $0x8] sm:$0xff]
        %v2047 = vadd.f32 %v2045, %v2022
        %v2048 = vadd.f32 %v2046, %v2027
        %2049 = vst.msk [vmem:[#allocation2] sm:$0xff] %vm550, %v2047
        %2050 = vst.msk [vmem:[#allocation2 + $0x8] sm:$0xff] %vm550, %v2048
        %p2051 = scmp.eq.s32.totalorder %s29, 3
        // Predicated region
        $region73: #{tpu_custom_call.1} parent=67 // pred_check
          %p2052 = pneg %p2051
        $region74: #{tpu_custom_call.1} parent=67 // pred_check_branch
          %2054 = sbr.rel (%p2052) target = $region76
        $region75: #{tpu_custom_call.1} parent=67 // pred_region
          %v2055 = vld [vmem:[#allocation2] sm:$0xff]
          %v2056 = vld [vmem:[#allocation2 + $0x8] sm:$0xff]
          %v2057 = vsel %vm550, %v2055, 0.0
          %2058 = vadd.xlane.f32.xlu0 %v2057
          %v2059 = vpop.xlane.xlu0 %2058
          %v2060 = vsel %vm550, %v2056, 0.0
          %2061 = vadd.xlane.f32.xlu0 %v2060
          %v2062 = vpop.xlane.xlu0 %2061
          %v2063 = vrcp.pop 32.0
          %v2064 = vmul.f32 %v2059, %v2063
          %v2065 = vmul.f32 %v2062, %v2063
          %v2066 = vsub.f32 %v2055, %v2064
          %v2067 = vsub.f32 %v2056, %v2065
          %v2068 = vmul.f32 %v2066, %v2066
          %v2069 = vmul.f32 %v2067, %v2067
          %v2070 = vsel %vm550, %v2068, 0.0
          %2071 = vadd.xlane.f32.xlu0 %v2070
          %v2072 = vpop.xlane.xlu0 %2071
          %v2073 = vsel %vm550, %v2069, 0.0
          %2074 = vadd.xlane.f32.xlu0 %v2073
          %v2075 = vpop.xlane.xlu0 %2074
          %v2076 = vmul.f32 %v2072, %v2063
          %v2077 = vmul.f32 %v2075, %v2063
          %v2078 = vadd.f32 %v2076, 1e-12
          %v2079 = vadd.f32 %v2077, 1e-12
          %v2080 = vrsqrt.pop %v2078
          %v2081 = vrsqrt.pop %v2079
          %v2082 = vmul.f32 %v2066, %v2080
          %v2083 = vmul.f32 %v2067, %v2081
          %v2084 = vld [vmem:[%s10] sm:$0x1]
          %v2086 = vlaneseq
          %v2087 = vshrl.u32 %v2086, 7
          %v2088 = vsub.s32 0, %v2087
          %v2089 = vrot.slane %v2084, %v2088
          %v2091 = vmul.f32 %v2082, %v2089
          %v2092 = vmul.f32 %v2083, %v2089
          %v2093 = vld [vmem:[%s11] sm:$0x1]
          %v2095 = vlaneseq
          %v2096 = vshrl.u32 %v2095, 7
          %v2097 = vsub.s32 0, %v2096
          %v2098 = vrot.slane %v2093, %v2097
          %v2100 = vadd.f32 %v2091, %v2098
          %v2101 = vadd.f32 %v2092, %v2098
          %2102 = vst.msk [vmem:[#allocation3] sm:$0xff] %vm550, %v2100
          %2103 = vst.msk [vmem:[#allocation3 + $0x8] sm:$0xff] %vm550, %v2101
        $region76: #{tpu_custom_call.1} parent=67 // pred_fallthru
          _
        %s2104 = sand.u32 %s345, 1
        %s2105 = scalar_lea.sflag [#allocation6], %s2104
        %s2106 = sand.u32 %s345, 1
        %s2107 = smul.addr %s2106, 16
        %s2108 = scalar_lea.vmem [#allocation5], %s2107
        // Predicated region
        $region77: #{tpu_custom_call.1} parent=67 // pred_check
          %p2109 = pneg %p329
        $region78: #{tpu_custom_call.1} parent=67 // pred_check_branch
          %2111 = sbr.rel (%p2109) target = $region80
        $region79: #{tpu_custom_call.1} parent=67 // pred_region
          %s2113 = ssub.s32 256, 256
          %2114 = vsyncadd [#allocation4], %s2113
          %s2115 = sshll.u32 [#allocation3], 4
          %s2116 = int_to_ptr.vmem [resolvable:$true] %s2115
          %2121 = dma.vmem_to_hbm [thread:$0]  %s2116, 256, %s12, [#allocation4], 128, 128, 8
        $region80: #{tpu_custom_call.1} parent=67 // pred_fallthru
          _
        // Predicated region
        $region81: #{tpu_custom_call.1} parent=67 // pred_check
          %p2122 = pneg %p355
        $region82: #{tpu_custom_call.1} parent=67 // pred_check_branch
          %2124 = sbr.rel (%p2122) target = $region84
        $region83: #{tpu_custom_call.1} parent=67 // pred_region
          %s2126 = ssub.s32 256, 256
          %2127 = vsyncadd %s2105, %s2126
          %s2128 = smul.addr %s29, 2
          %s2129 = smul.addr %s2128, 128
          %s2130 = scalar_lea.hbm %s13, %s2129
          %s2131 = sshll.u32 %s2108, 4
          %s2132 = int_to_ptr.vmem [resolvable:$true] %s2131
          %2137 = dma.vmem_to_hbm [thread:$0]  %s2132, 256, %s2130, %s2105, 128, 128, 8
        $region84: #{tpu_custom_call.1} parent=67 // pred_fallthru
          _
        // Predicated region
        $region85: #{tpu_custom_call.1} parent=67 // pred_check
          %p2138 = pneg %p329
        $region86: #{tpu_custom_call.1} parent=67 // pred_check_branch
          %2140 = sbr.rel (%p2138) target = $region88
        $region87: #{tpu_custom_call.1} parent=67 // pred_region
          %2141 = dma.done [#allocation4], 256
        $region88: #{tpu_custom_call.1} parent=67 // pred_fallthru
          _
      $region68: #{tpu_custom_call.1} parent=5 // pred_fallthru
        _
      %p2142 = scmp.le.s32.totalorder 2, %s24
      // Predicated region
      $region89: #{tpu_custom_call.1} parent=5 // pred_check
        %p2143 = pneg %p2142
      $region90: #{tpu_custom_call.1} parent=5 // pred_check_branch
        %2145 = sbr.rel (%p2143) target = $region92
      $region91: #{tpu_custom_call.1} parent=5 // pred_region
        %s2146 = ssub.s32 %s24, 2
        // Predicated region
        $region93: #{tpu_custom_call.1} parent=91 // pred_check
          %p2147 = pneg %p361
        $region94: #{tpu_custom_call.1} parent=91 // pred_check_branch
          %2149 = sbr.rel (%p2147) target = $region96
        $region95: #{tpu_custom_call.1} parent=91 // pred_region
          %s2150 = sand.u32 %s346, 1
          %s2151 = scalar_lea.sflag [#allocation6], %s2150
          %s2152 = sand.u32 %s346, 1
          %s2153 = smul.addr %s2152, 16
          %s2154 = scalar_lea.vmem [#allocation5], %s2153
          %2155 = dma.done %s2151, 256
        $region96: #{tpu_custom_call.1} parent=91 // pred_fallthru
          _
      $region92: #{tpu_custom_call.1} parent=5 // pred_fallthru
        _
    $region6: #{tpu_custom_call.1} parent=1 // loop_footer
      %s28 = sadd.s32 1, %s24
    $region7: #{tpu_custom_call.1} parent=1 // loop_footer_branch
      %23 = sbr.rel target = $region3
    $region8: #{tpu_custom_call.1} parent=1 // loop_exit
      _
    %2156 = vsyncpa [#allocation4], 1
    %s2157 = scalar_lea.sflag [#allocation4], 1
    %2158 = vsyncpa %s2157, 1
    %2159 = vsyncpa [#allocation6], 1
    %s2160 = scalar_lea.sflag [#allocation6], 1
    %2161 = vsyncpa %s2160, 1

</llo_original>
